<compile_context>
chip_gen: v5e
topology: v5e:2x2
jax: 0.10.0
libtpu: 0.0.40
codegen_flags: <defaults>
</compile_context>

<pallas_src>
import functools

import jax
import jax.numpy as jnp
from jax.experimental import pallas as pl
from jax.experimental.pallas import tpu as pltpu


# ----------------------------- fused encoder kernel -------------------------


def fused_t5_encoder_kernel(h_ref, mask_ref, pb_ref,
                            ln1_ref, wq_ref, wk_ref, wv_ref, wo_ref,
                            ln2_ref, wi_ref, wof_ref, fln_ref,
                            out_ref, x_scr, attn_scr,
                            *, n_heads, d_kv, eps=1e-6):
    """Grid = (batch, layer).  Residual stream resident in f32 VMEM scratch."""
    layer = pl.program_id(1)
    n_layers = pl.num_programs(1)

    # Layer 0: load the bf16 embedding block into the resident f32 scratch.
    @pl.when(layer == 0)
    def _():
        x_scr[...] = h_ref[0].astype(jnp.float32)

    x = x_scr[...]                                     # (S, D) f32 residual

    # Shared rel-pos bias + additive key mask: one broadcast per layer,
    # NOT one per head.
    bias = pb_ref[...].astype(jnp.float32) + mask_ref[0, 0][None, None, :]

    # ---------------- self-attention block (T5: no 1/sqrt(dk) scale) --------
    var = jnp.mean(x * x, axis=-1, keepdims=True)
    xn = (x * jax.lax.rsqrt(var + eps)) * ln1_ref[0, 0].astype(jnp.float32)
    xn_b = xn.astype(jnp.bfloat16)

    # bf16 MXU operands, f32 accumulation.
    q = jnp.dot(xn_b, wq_ref[0],
                preferred_element_type=jnp.float32).astype(jnp.bfloat16)
    k = jnp.dot(xn_b, wk_ref[0],
                preferred_element_type=jnp.float32).astype(jnp.bfloat16)
    v = jnp.dot(xn_b, wv_ref[0],
                preferred_element_type=jnp.float32).astype(jnp.bfloat16)

    # Per-head attention; head outputs written directly into a lane-dense
    # (S, H*d_kv) VMEM scratch slice (no concatenate / relayout).
    # TODO(synk): flash-style kv tiling for real S=512 shapes.
    for hh in range(n_heads):
        sl = slice(hh * d_kv, (hh + 1) * d_kv)
        scores = jnp.dot(q[:, sl], k[:, sl].T,
                         preferred_element_type=jnp.float32)    # (S, S) f32
        scores = scores + bias[hh]
        m = jnp.max(scores, axis=-1, keepdims=True)
        p = jnp.exp(scores - m)
        denom = jnp.sum(p, axis=-1, keepdims=True)
        p = p * pl.reciprocal(denom, approx=True)               # EUP, not VALU div
        ctx = jnp.dot(p.astype(jnp.bfloat16), v[:, sl],
                      preferred_element_type=jnp.float32)       # (S, d_kv)
        attn_scr[:, sl] = ctx.astype(jnp.bfloat16)

    # Single full-width (S, inner) x (inner, D) output projection.
    x = x + jnp.dot(attn_scr[...], wo_ref[0],
                    preferred_element_type=jnp.float32)

    # ---------------- feed-forward block -------------------------------------
    var2 = jnp.mean(x * x, axis=-1, keepdims=True)
    xn2 = (x * jax.lax.rsqrt(var2 + eps)) * ln2_ref[0, 0].astype(jnp.float32)
    # TODO(synk): chunk d_ff with a dedicated grid axis for real 768x3072 shapes.
    hid = jnp.dot(xn2.astype(jnp.bfloat16), wi_ref[0],
                  preferred_element_type=jnp.float32)
    hid = jnp.maximum(hid, 0.0).astype(jnp.bfloat16)
    x = x + jnp.dot(hid, wof_ref[0], preferred_element_type=jnp.float32)

    x_scr[...] = x

    # ---------------- final RMSNorm fused into the last layer ----------------
    @pl.when(layer == n_layers - 1)
    def _():
        var3 = jnp.mean(x * x, axis=-1, keepdims=True)
        out_ref[0] = (x * jax.lax.rsqrt(var3 + eps)
                      * fln_ref[0].astype(jnp.float32)).astype(out_ref.dtype)


# ----------------------------- pallas_call wrapper ---------------------------


def _vmem_limit_bytes(S, D, H, d_kv, d_ff):
    inner = H * d_kv
    blk = (S * D * 2                          # hidden block (bf16)
           + S * 4                            # mask bias (f32)
           + H * S * S * 2                    # position bias (bf16)
           + 2 * D * 4                        # ln1 + ln2 (f32)
           + (3 * D * inner + inner * D) * 2  # wq, wk, wv, wo (bf16)
           + 2 * D * d_ff * 2                 # wi, wo_ff (bf16)
           + D * 4                            # final_ln (f32)
           + S * D * 4)                       # output block (f32)
    scratch = S * D * 4 + S * inner * 2
    total = 2 * blk + scratch + (4 << 20)     # double buffering + headroom
    return int(max(32 << 20, min(total, 100 << 20)))


def t5_encoder_forward(params, cfg, input_ids, attention_mask):
    B, S = input_ids.shape
    D, d_ff = cfg["d_model"], cfg["d_ff"]
    H, d_kv, L = cfg["n_heads"], cfg["d_kv"], cfg["n_layers"]
    inner = H * d_kv

    h = jnp.take(params["embed"], input_ids, axis=0)            # (B, S, D) bf16
    mask_bias = ((1.0 - attention_mask.astype(jnp.float32)) * -1e9
                 ).reshape(B, 1, S)
    pos_bias = compute_position_bias(
        params["rel_attn_bias"], S, cfg["num_buckets"], cfg["max_distance"]
    ).astype(jnp.bfloat16)                                       # (H, S, S)

    kernel = functools.partial(fused_t5_encoder_kernel, n_heads=H, d_kv=d_kv)

    def wspec(shape):   # per-layer stacked weight: pick layer `l`
        return pl.BlockSpec((1,) + shape, lambda b, l: (l, 0, 0))

    return pl.pallas_call(
        kernel,
        out_shape=jax.ShapeDtypeStruct((B, S, D), jnp.float32),
        grid=(B, L),
        in_specs=[
            pl.BlockSpec((1, S, D), lambda b, l: (b, 0, 0)),     # embeddings
            pl.BlockSpec((1, 1, S), lambda b, l: (b, 0, 0)),     # mask bias
            pl.BlockSpec((H, S, S), lambda b, l: (0, 0, 0)),     # rel-pos bias
            wspec((1, D)),                                       # ln1
            wspec((D, inner)),                                   # wq
            wspec((D, inner)),                                   # wk
            wspec((D, inner)),                                   # wv
            wspec((inner, D)),                                   # wo
            wspec((1, D)),                                       # ln2
            wspec((D, d_ff)),                                    # wi
            wspec((d_ff, D)),                                    # wo_ff
            pl.BlockSpec((1, D), lambda b, l: (0, 0)),           # final_ln
        ],
        out_specs=pl.BlockSpec((1, S, D), lambda b, l: (b, 0, 0)),
        scratch_shapes=[
            pltpu.VMEM((S, D), jnp.float32),       # resident residual stream
            pltpu.VMEM((S, inner), jnp.bfloat16),  # attention head outputs
        ],
        compiler_params=pltpu.CompilerParams(
            dimension_semantics=("parallel", "arbitrary"),
            vmem_limit_bytes=_vmem_limit_bytes(S, D, H, d_kv, d_ff)),
    )(h, mask_bias, pos_bias,
      params["ln1"], params["wq"], params["wk"], params["wv"], params["wo"],
      params["ln2"], params["wi"], params["wo_ff"], params["final_ln"])


# ----------------------------- T5 glue (plain JAX) ---------------------------


def relative_position_bucket(relative_position, num_buckets=32, max_distance=128):
    # Bidirectional (encoder) bucketing, as in HF T5.
    num_buckets = num_buckets // 2
    rel_buckets = (relative_position > 0).astype(jnp.int32) * num_buckets
    n = jnp.abs(relative_position)
    max_exact = num_buckets // 2
    is_small = n < max_exact
    val_if_large = max_exact + (
        jnp.log(jnp.maximum(n, 1).astype(jnp.float32) / max_exact)
        / jnp.log(max_distance / max_exact)
        * (num_buckets - max_exact)
    ).astype(jnp.int32)
    val_if_large = jnp.minimum(val_if_large, num_buckets - 1)
    rel_buckets = rel_buckets + jnp.where(is_small, n, val_if_large)
    return rel_buckets


def compute_position_bias(rel_attn_bias, seq_len, num_buckets, max_distance):
    ctx = jnp.arange(seq_len)[:, None]
    mem = jnp.arange(seq_len)[None, :]
    rel_pos = mem - ctx                                     # (S, S)
    buckets = relative_position_bucket(rel_pos, num_buckets, max_distance)
    bias = jnp.take(rel_attn_bias, buckets, axis=0)         # (S, S, H)
    return jnp.transpose(bias, (2, 0, 1))                   # (H, S, S)


# ----------------------------- EncoderWrapper --------------------------------


class EncoderWrapper:
    """Mirrors FAVOR/CodeT5 EncoderWrapper.forward semantics (eval mode)."""

    def __init__(self, params, cfg):
        self.main_input_name = "input_ids"
        self.params = params
        self.cfg = cfg
        self.gnn_out = None   # same as the PyTorch module __init__
        # TODO(synk): CheckpointWrapper only affects gradient checkpointing in
        # training; it is an identity for the forward pass and is not needed.

    def __call__(self, input_ids=None, attention_mask=None, ggnn_output=None):
        input_ids = input_ids[:, :512]
        attention_mask = attention_mask[:, :512]
        last_hidden_state = t5_encoder_forward(
            self.params, self.cfg, input_ids, attention_mask)
        if self.gnn_out is not None:
            last_hidden_state = jnp.concatenate(
                [last_hidden_state, self.gnn_out], axis=1)
        return last_hidden_state


# ----------------------------- deterministic init ----------------------------


def init_params(key, cfg):
    D, d_ff = cfg["d_model"], cfg["d_ff"]
    L, H, d_kv = cfg["n_layers"], cfg["n_heads"], cfg["d_kv"]
    inner = H * d_kv

    def nrm(k, shape, scale=0.02, dtype=jnp.bfloat16):
        return (scale * jax.random.normal(k, shape)).astype(dtype)

    keys = jax.random.split(key, 8)
    return {
        "embed": nrm(keys[0], (cfg["vocab"], D), 1.0, jnp.bfloat16),
        "rel_attn_bias": nrm(keys[1], (cfg["num_buckets"], H), 0.02, jnp.float32),
        "ln1": jnp.ones((L, 1, D), jnp.float32),
        "wq": nrm(keys[2], (L, D, inner)),
        "wk": nrm(keys[3], (L, D, inner)),
        "wv": nrm(keys[4], (L, D, inner)),
        "wo": nrm(keys[5], (L, inner, D)),
        "ln2": jnp.ones((L, 1, D), jnp.float32),
        "wi": nrm(keys[6], (L, D, d_ff)),
        "wo_ff": nrm(keys[7], (L, d_ff, D)),
        "final_ln": jnp.ones((1, D), jnp.float32),
    }


# ----------------------------- main -------------------------------------------


if __name__ == "__main__":
    cfg = dict(vocab=100, d_model=32, d_ff=64, n_heads=4, d_kv=8,
               n_layers=2, num_buckets=32, max_distance=128)
    B, S = 2, 8

    key = jax.random.PRNGKey(0)
    k_ids, k_params = jax.random.split(key)
    input_ids = jax.random.randint(k_ids, (B, S), 0, cfg["vocab"], dtype=jnp.int32)
    attention_mask = jnp.ones((B, S), jnp.int32)

    params = init_params(k_params, cfg)
    encoder = EncoderWrapper(params, cfg)

    out = encoder(input_ids=input_ids, attention_mask=attention_mask)
    jax.block_until_ready(out)
    assert out.shape == (B, S, cfg["d_model"])
    print("KERNEL_OK")
</pallas_src>

<mosaic_0001>
module attributes {stable_mosaic.version = 11 : i64} {
  func.func @fused_t5_encoder_kernel(%arg0: i32, %arg1: i32, %arg2: memref<1x8x32xbf16, #tpu.memory_space<vmem>>, %arg3: memref<1x1x8xf32, #tpu.memory_space<vmem>>, %arg4: memref<4x8x8xbf16, #tpu.memory_space<vmem>>, %arg5: memref<1x1x32xf32, #tpu.memory_space<vmem>>, %arg6: memref<1x32x32xbf16, #tpu.memory_space<vmem>>, %arg7: memref<1x32x32xbf16, #tpu.memory_space<vmem>>, %arg8: memref<1x32x32xbf16, #tpu.memory_space<vmem>>, %arg9: memref<1x32x32xbf16, #tpu.memory_space<vmem>>, %arg10: memref<1x1x32xf32, #tpu.memory_space<vmem>>, %arg11: memref<1x32x64xbf16, #tpu.memory_space<vmem>>, %arg12: memref<1x64x32xbf16, #tpu.memory_space<vmem>>, %arg13: memref<1x32xf32, #tpu.memory_space<vmem>>, %arg14: memref<1x8x32xf32, #tpu.memory_space<vmem>>, %arg15: memref<8x32xf32, #tpu.memory_space<vmem>>, %arg16: memref<8x32xbf16, #tpu.memory_space<vmem>>) attributes {dimension_semantics = [#tpu.dimension_semantics<parallel>, #tpu.dimension_semantics<arbitrary>], iteration_bounds = array<i64: 2, 2>, scalar_prefetch = 0 : i64, scratch_operands = 2 : i64, tpu.core_type = #tpu.core_type<tc>, window_params = [{transform_indices = @transform_0, window_bounds = array<i64: 1, 8, 32>}, {transform_indices = @transform_1, window_bounds = array<i64: 1, 1, 8>}, {pipeline_mode = #tpu.pipeline_mode<synchronous>, transform_indices = @transform_2, window_bounds = array<i64: 4, 8, 8>}, {transform_indices = @transform_3, window_bounds = array<i64: 1, 1, 32>}, {transform_indices = @transform_4, window_bounds = array<i64: 1, 32, 32>}, {transform_indices = @transform_5, window_bounds = array<i64: 1, 32, 32>}, {transform_indices = @transform_6, window_bounds = array<i64: 1, 32, 32>}, {transform_indices = @transform_7, window_bounds = array<i64: 1, 32, 32>}, {transform_indices = @transform_8, window_bounds = array<i64: 1, 1, 32>}, {transform_indices = @transform_9, window_bounds = array<i64: 1, 32, 64>}, {transform_indices = @transform_10, window_bounds = array<i64: 1, 64, 32>}, {pipeline_mode = #tpu.pipeline_mode<synchronous>, transform_indices = @transform_11, window_bounds = array<i64: 1, 32>}, {transform_indices = @transform_12, window_bounds = array<i64: 1, 8, 32>}]} {
    %c0_i32 = arith.constant 0 : i32
    %0 = arith.cmpi eq, %arg1, %c0_i32 : i32
    %1 = arith.extui %0 : i1 to i32
    %c0_i32_0 = arith.constant 0 : i32
    %2 = arith.cmpi ne, %1, %c0_i32_0 : i32
    scf.if %2 {
      %c0_70 = arith.constant 0 : index
      %c0_71 = arith.constant 0 : index
      %c0_72 = arith.constant 0 : index
      %162 = vector.load %arg2[%c0_70, %c0_71, %c0_72] : memref<1x8x32xbf16, #tpu.memory_space<vmem>>, vector<1x8x32xbf16>
      %163 = vector.shape_cast %162 : vector<1x8x32xbf16> to vector<8x32xbf16>
      %164 = arith.extf %163 : vector<8x32xbf16> to vector<8x32xf32>
      %c0_73 = arith.constant 0 : index
      %c0_74 = arith.constant 0 : index
      %165 = vector.load %arg15[%c0_73, %c0_74] : memref<8x32xf32, #tpu.memory_space<vmem>>, vector<8x32xf32>
      tpu.vector_store %arg15[%c0_73, %c0_74], %164 {strides = array<i32>} : memref<8x32xf32, #tpu.memory_space<vmem>>, vector<8x32xf32>,
    } else {
    }
    %c0 = arith.constant 0 : index
    %c0_1 = arith.constant 0 : index
    %3 = vector.load %arg15[%c0, %c0_1] : memref<8x32xf32, #tpu.memory_space<vmem>>, vector<8x32xf32>
    %c0_2 = arith.constant 0 : index
    %c0_3 = arith.constant 0 : index
    %c0_4 = arith.constant 0 : index
    %4 = vector.load %arg4[%c0_2, %c0_3, %c0_4] : memref<4x8x8xbf16, #tpu.memory_space<vmem>>, vector<4x8x8xbf16>
    %5 = arith.extf %4 : vector<4x8x8xbf16> to vector<4x8x8xf32>
    %c0_5 = arith.constant 0 : index
    %c0_6 = arith.constant 0 : index
    %c0_7 = arith.constant 0 : index
    %6 = vector.load %arg3[%c0_5, %c0_6, %c0_7] : memref<1x1x8xf32, #tpu.memory_space<vmem>>, vector<1x1x8xf32>
    %7 = vector.shape_cast %6 : vector<1x1x8xf32> to vector<8xf32>
    %8 = vector.shape_cast %7 : vector<8xf32> to vector<1x1x8xf32>
    %9 = vector.broadcast %8 : vector<1x1x8xf32> to vector<4x8x8xf32>
    %10 = arith.addf %5, %9 : vector<4x8x8xf32>
    %11 = arith.mulf %3, %3 : vector<8x32xf32>
    %cst = arith.constant dense<0.000000e+00> : vector<8xf32>
    %12 = vector.multi_reduction <add>, %11, %cst [1] : vector<8x32xf32> to vector<8xf32>
    %13 = vector.shape_cast %12 : vector<8xf32> to vector<8x1xf32>
    %cst_8 = arith.constant 3.200000e+01 : f32
    %14 = vector.broadcast %cst_8 : f32 to vector<8x1xf32>
    %15 = arith.divf %13, %14 : vector<8x1xf32>
    %cst_9 = arith.constant 9.99999997E-7 : f32
    %16 = vector.broadcast %cst_9 : f32 to vector<8x1xf32>
    %17 = arith.addf %15, %16 : vector<8x1xf32>
    %18 = math.rsqrt %17 : vector<8x1xf32>
    %19 = vector.broadcast %18 : vector<8x1xf32> to vector<8x32xf32>
    %20 = arith.mulf %3, %19 : vector<8x32xf32>
    %c0_10 = arith.constant 0 : index
    %c0_11 = arith.constant 0 : index
    %c0_12 = arith.constant 0 : index
    %21 = vector.load %arg5[%c0_10, %c0_11, %c0_12] : memref<1x1x32xf32, #tpu.memory_space<vmem>>, vector<1x1x32xf32>
    %22 = vector.shape_cast %21 : vector<1x1x32xf32> to vector<32xf32>
    %23 = vector.shape_cast %22 : vector<32xf32> to vector<1x32xf32>
    %24 = vector.broadcast %23 : vector<1x32xf32> to vector<8x32xf32>
    %25 = arith.mulf %20, %24 : vector<8x32xf32>
    %26 = arith.truncf %25 : vector<8x32xf32> to vector<8x32xbf16>
    %c0_13 = arith.constant 0 : index
    %c0_14 = arith.constant 0 : index
    %c0_15 = arith.constant 0 : index
    %27 = vector.load %arg6[%c0_13, %c0_14, %c0_15] : memref<1x32x32xbf16, #tpu.memory_space<vmem>>, vector<1x32x32xbf16>
    %28 = vector.shape_cast %27 : vector<1x32x32xbf16> to vector<32x32xbf16>
    %cst_16 = arith.constant dense<0.000000e+00> : vector<8x32xf32>
    %29 = tpu.matmul %26, %28, %cst_16 {dimension_numbers = #tpu.dot_dimension_numbers<[1], [0], [0], [1], [0, 0, 1, 1], [], []>} : vector<8x32xbf16>, vector<32x32xbf16>, vector<8x32xf32> -> vector<8x32xf32>
    %30 = arith.truncf %29 : vector<8x32xf32> to vector<8x32xbf16>
    %c0_17 = arith.constant 0 : index
    %c0_18 = arith.constant 0 : index
    %c0_19 = arith.constant 0 : index
    %31 = vector.load %arg7[%c0_17, %c0_18, %c0_19] : memref<1x32x32xbf16, #tpu.memory_space<vmem>>, vector<1x32x32xbf16>
    %32 = vector.shape_cast %31 : vector<1x32x32xbf16> to vector<32x32xbf16>
    %cst_20 = arith.constant dense<0.000000e+00> : vector<8x32xf32>
    %33 = tpu.matmul %26, %32, %cst_20 {dimension_numbers = #tpu.dot_dimension_numbers<[1], [0], [0], [1], [0, 0, 1, 1], [], []>} : vector<8x32xbf16>, vector<32x32xbf16>, vector<8x32xf32> -> vector<8x32xf32>
    %34 = arith.truncf %33 : vector<8x32xf32> to vector<8x32xbf16>
    %c0_21 = arith.constant 0 : index
    %c0_22 = arith.constant 0 : index
    %c0_23 = arith.constant 0 : index
    %35 = vector.load %arg8[%c0_21, %c0_22, %c0_23] : memref<1x32x32xbf16, #tpu.memory_space<vmem>>, vector<1x32x32xbf16>
    %36 = vector.shape_cast %35 : vector<1x32x32xbf16> to vector<32x32xbf16>
    %cst_24 = arith.constant dense<0.000000e+00> : vector<8x32xf32>
    %37 = tpu.matmul %26, %36, %cst_24 {dimension_numbers = #tpu.dot_dimension_numbers<[1], [0], [0], [1], [0, 0, 1, 1], [], []>} : vector<8x32xbf16>, vector<32x32xbf16>, vector<8x32xf32> -> vector<8x32xf32>
    %38 = arith.truncf %37 : vector<8x32xf32> to vector<8x32xbf16>
    %39 = vector.extract_strided_slice %30 {offsets = [0, 0], sizes = [8, 8], strides = [1, 1]} : vector<8x32xbf16> to vector<8x8xbf16>
    %40 = vector.extract_strided_slice %34 {offsets = [0, 0], sizes = [8, 8], strides = [1, 1]} : vector<8x32xbf16> to vector<8x8xbf16>
    %41 = tpu.transpose %40, [1, 0] : vector<8x8xbf16> -> vector<8x8xbf16>
    %cst_25 = arith.constant dense<0.000000e+00> : vector<8x8xf32>
    %42 = tpu.matmul %39, %41, %cst_25 {dimension_numbers = #tpu.dot_dimension_numbers<[1], [0], [0], [1], [0, 0, 1, 1], [], []>} : vector<8x8xbf16>, vector<8x8xbf16>, vector<8x8xf32> -> vector<8x8xf32>
    %43 = vector.extract_strided_slice %10 {offsets = [0, 0, 0], sizes = [1, 8, 8], strides = [1, 1, 1]} : vector<4x8x8xf32> to vector<1x8x8xf32>
    %44 = vector.shape_cast %43 : vector<1x8x8xf32> to vector<8x8xf32>
    %45 = arith.addf %42, %44 : vector<8x8xf32>
    %cst_26 = arith.constant dense<0xFF800000> : vector<8xf32>
    %46 = vector.multi_reduction <maximumf>, %45, %cst_26 [1] : vector<8x8xf32> to vector<8xf32>
    %47 = vector.shape_cast %46 : vector<8xf32> to vector<8x1xf32>
    %48 = vector.broadcast %47 : vector<8x1xf32> to vector<8x8xf32>
    %49 = arith.subf %45, %48 : vector<8x8xf32>
    %50 = math.exp %49 : vector<8x8xf32>
    %cst_27 = arith.constant dense<0.000000e+00> : vector<8xf32>
    %51 = vector.multi_reduction <add>, %50, %cst_27 [1] : vector<8x8xf32> to vector<8xf32>
    %52 = vector.shape_cast %51 : vector<8xf32> to vector<8x1xf32>
    %53 = tpu.reciprocal %52 {approx = true} : vector<8x1xf32> -> vector<8x1xf32>
    %54 = vector.broadcast %53 : vector<8x1xf32> to vector<8x8xf32>
    %55 = arith.mulf %50, %54 : vector<8x8xf32>
    %56 = arith.truncf %55 : vector<8x8xf32> to vector<8x8xbf16>
    %57 = vector.extract_strided_slice %38 {offsets = [0, 0], sizes = [8, 8], strides = [1, 1]} : vector<8x32xbf16> to vector<8x8xbf16>
    %cst_28 = arith.constant dense<0.000000e+00> : vector<8x8xf32>
    %58 = tpu.matmul %56, %57, %cst_28 {dimension_numbers = #tpu.dot_dimension_numbers<[1], [0], [0], [1], [0, 0, 1, 1], [], []>} : vector<8x8xbf16>, vector<8x8xbf16>, vector<8x8xf32> -> vector<8x8xf32>
    %59 = arith.truncf %58 : vector<8x8xf32> to vector<8x8xbf16>
    %c0_29 = arith.constant 0 : index
    %c0_30 = arith.constant 0 : index
    %60 = vector.load %arg16[%c0_29, %c0_30] : memref<8x32xbf16, #tpu.memory_space<vmem>>, vector<8x8xbf16>
    tpu.vector_store %arg16[%c0_29, %c0_30], %59 {strides = array<i32>} : memref<8x32xbf16, #tpu.memory_space<vmem>>, vector<8x8xbf16>,
    %61 = vector.extract_strided_slice %30 {offsets = [0, 8], sizes = [8, 8], strides = [1, 1]} : vector<8x32xbf16> to vector<8x8xbf16>
    %62 = vector.extract_strided_slice %34 {offsets = [0, 8], sizes = [8, 8], strides = [1, 1]} : vector<8x32xbf16> to vector<8x8xbf16>
    %63 = tpu.transpose %62, [1, 0] : vector<8x8xbf16> -> vector<8x8xbf16>
    %cst_31 = arith.constant dense<0.000000e+00> : vector<8x8xf32>
    %64 = tpu.matmul %61, %63, %cst_31 {dimension_numbers = #tpu.dot_dimension_numbers<[1], [0], [0], [1], [0, 0, 1, 1], [], []>} : vector<8x8xbf16>, vector<8x8xbf16>, vector<8x8xf32> -> vector<8x8xf32>
    %65 = vector.extract_strided_slice %10 {offsets = [1, 0, 0], sizes = [1, 8, 8], strides = [1, 1, 1]} : vector<4x8x8xf32> to vector<1x8x8xf32>
    %66 = vector.shape_cast %65 : vector<1x8x8xf32> to vector<8x8xf32>
    %67 = arith.addf %64, %66 : vector<8x8xf32>
    %cst_32 = arith.constant dense<0xFF800000> : vector<8xf32>
    %68 = vector.multi_reduction <maximumf>, %67, %cst_32 [1] : vector<8x8xf32> to vector<8xf32>
    %69 = vector.shape_cast %68 : vector<8xf32> to vector<8x1xf32>
    %70 = vector.broadcast %69 : vector<8x1xf32> to vector<8x8xf32>
    %71 = arith.subf %67, %70 : vector<8x8xf32>
    %72 = math.exp %71 : vector<8x8xf32>
    %cst_33 = arith.constant dense<0.000000e+00> : vector<8xf32>
    %73 = vector.multi_reduction <add>, %72, %cst_33 [1] : vector<8x8xf32> to vector<8xf32>
    %74 = vector.shape_cast %73 : vector<8xf32> to vector<8x1xf32>
    %75 = tpu.reciprocal %74 {approx = true} : vector<8x1xf32> -> vector<8x1xf32>
    %76 = vector.broadcast %75 : vector<8x1xf32> to vector<8x8xf32>
    %77 = arith.mulf %72, %76 : vector<8x8xf32>
    %78 = arith.truncf %77 : vector<8x8xf32> to vector<8x8xbf16>
    %79 = vector.extract_strided_slice %38 {offsets = [0, 8], sizes = [8, 8], strides = [1, 1]} : vector<8x32xbf16> to vector<8x8xbf16>
    %cst_34 = arith.constant dense<0.000000e+00> : vector<8x8xf32>
    %80 = tpu.matmul %78, %79, %cst_34 {dimension_numbers = #tpu.dot_dimension_numbers<[1], [0], [0], [1], [0, 0, 1, 1], [], []>} : vector<8x8xbf16>, vector<8x8xbf16>, vector<8x8xf32> -> vector<8x8xf32>
    %81 = arith.truncf %80 : vector<8x8xf32> to vector<8x8xbf16>
    %c0_35 = arith.constant 0 : index
    %c8 = arith.constant 8 : index
    %82 = vector.load %arg16[%c0_35, %c8] : memref<8x32xbf16, #tpu.memory_space<vmem>>, vector<8x8xbf16>
    tpu.vector_store %arg16[%c0_35, %c8], %81 {strides = array<i32>} : memref<8x32xbf16, #tpu.memory_space<vmem>>, vector<8x8xbf16>,
    %83 = vector.extract_strided_slice %30 {offsets = [0, 16], sizes = [8, 8], strides = [1, 1]} : vector<8x32xbf16> to vector<8x8xbf16>
    %84 = vector.extract_strided_slice %34 {offsets = [0, 16], sizes = [8, 8], strides = [1, 1]} : vector<8x32xbf16> to vector<8x8xbf16>
    %85 = tpu.transpose %84, [1, 0] : vector<8x8xbf16> -> vector<8x8xbf16>
    %cst_36 = arith.constant dense<0.000000e+00> : vector<8x8xf32>
    %86 = tpu.matmul %83, %85, %cst_36 {dimension_numbers = #tpu.dot_dimension_numbers<[1], [0], [0], [1], [0, 0, 1, 1], [], []>} : vector<8x8xbf16>, vector<8x8xbf16>, vector<8x8xf32> -> vector<8x8xf32>
    %87 = vector.extract_strided_slice %10 {offsets = [2, 0, 0], sizes = [1, 8, 8], strides = [1, 1, 1]} : vector<4x8x8xf32> to vector<1x8x8xf32>
    %88 = vector.shape_cast %87 : vector<1x8x8xf32> to vector<8x8xf32>
    %89 = arith.addf %86, %88 : vector<8x8xf32>
    %cst_37 = arith.constant dense<0xFF800000> : vector<8xf32>
    %90 = vector.multi_reduction <maximumf>, %89, %cst_37 [1] : vector<8x8xf32> to vector<8xf32>
    %91 = vector.shape_cast %90 : vector<8xf32> to vector<8x1xf32>
    %92 = vector.broadcast %91 : vector<8x1xf32> to vector<8x8xf32>
    %93 = arith.subf %89, %92 : vector<8x8xf32>
    %94 = math.exp %93 : vector<8x8xf32>
    %cst_38 = arith.constant dense<0.000000e+00> : vector<8xf32>
    %95 = vector.multi_reduction <add>, %94, %cst_38 [1] : vector<8x8xf32> to vector<8xf32>
    %96 = vector.shape_cast %95 : vector<8xf32> to vector<8x1xf32>
    %97 = tpu.reciprocal %96 {approx = true} : vector<8x1xf32> -> vector<8x1xf32>
    %98 = vector.broadcast %97 : vector<8x1xf32> to vector<8x8xf32>
    %99 = arith.mulf %94, %98 : vector<8x8xf32>
    %100 = arith.truncf %99 : vector<8x8xf32> to vector<8x8xbf16>
    %101 = vector.extract_strided_slice %38 {offsets = [0, 16], sizes = [8, 8], strides = [1, 1]} : vector<8x32xbf16> to vector<8x8xbf16>
    %cst_39 = arith.constant dense<0.000000e+00> : vector<8x8xf32>
    %102 = tpu.matmul %100, %101, %cst_39 {dimension_numbers = #tpu.dot_dimension_numbers<[1], [0], [0], [1], [0, 0, 1, 1], [], []>} : vector<8x8xbf16>, vector<8x8xbf16>, vector<8x8xf32> -> vector<8x8xf32>
    %103 = arith.truncf %102 : vector<8x8xf32> to vector<8x8xbf16>
    %c0_40 = arith.constant 0 : index
    %c16 = arith.constant 16 : index
    %104 = vector.load %arg16[%c0_40, %c16] : memref<8x32xbf16, #tpu.memory_space<vmem>>, vector<8x8xbf16>
    tpu.vector_store %arg16[%c0_40, %c16], %103 {strides = array<i32>} : memref<8x32xbf16, #tpu.memory_space<vmem>>, vector<8x8xbf16>,
    %105 = vector.extract_strided_slice %30 {offsets = [0, 24], sizes = [8, 8], strides = [1, 1]} : vector<8x32xbf16> to vector<8x8xbf16>
    %106 = vector.extract_strided_slice %34 {offsets = [0, 24], sizes = [8, 8], strides = [1, 1]} : vector<8x32xbf16> to vector<8x8xbf16>
    %107 = tpu.transpose %106, [1, 0] : vector<8x8xbf16> -> vector<8x8xbf16>
    %cst_41 = arith.constant dense<0.000000e+00> : vector<8x8xf32>
    %108 = tpu.matmul %105, %107, %cst_41 {dimension_numbers = #tpu.dot_dimension_numbers<[1], [0], [0], [1], [0, 0, 1, 1], [], []>} : vector<8x8xbf16>, vector<8x8xbf16>, vector<8x8xf32> -> vector<8x8xf32>
    %109 = vector.extract_strided_slice %10 {offsets = [3, 0, 0], sizes = [1, 8, 8], strides = [1, 1, 1]} : vector<4x8x8xf32> to vector<1x8x8xf32>
    %110 = vector.shape_cast %109 : vector<1x8x8xf32> to vector<8x8xf32>
    %111 = arith.addf %108, %110 : vector<8x8xf32>
    %cst_42 = arith.constant dense<0xFF800000> : vector<8xf32>
    %112 = vector.multi_reduction <maximumf>, %111, %cst_42 [1] : vector<8x8xf32> to vector<8xf32>
    %113 = vector.shape_cast %112 : vector<8xf32> to vector<8x1xf32>
    %114 = vector.broadcast %113 : vector<8x1xf32> to vector<8x8xf32>
    %115 = arith.subf %111, %114 : vector<8x8xf32>
    %116 = math.exp %115 : vector<8x8xf32>
    %cst_43 = arith.constant dense<0.000000e+00> : vector<8xf32>
    %117 = vector.multi_reduction <add>, %116, %cst_43 [1] : vector<8x8xf32> to vector<8xf32>
    %118 = vector.shape_cast %117 : vector<8xf32> to vector<8x1xf32>
    %119 = tpu.reciprocal %118 {approx = true} : vector<8x1xf32> -> vector<8x1xf32>
    %120 = vector.broadcast %119 : vector<8x1xf32> to vector<8x8xf32>
    %121 = arith.mulf %116, %120 : vector<8x8xf32>
    %122 = arith.truncf %121 : vector<8x8xf32> to vector<8x8xbf16>
    %123 = vector.extract_strided_slice %38 {offsets = [0, 24], sizes = [8, 8], strides = [1, 1]} : vector<8x32xbf16> to vector<8x8xbf16>
    %cst_44 = arith.constant dense<0.000000e+00> : vector<8x8xf32>
    %124 = tpu.matmul %122, %123, %cst_44 {dimension_numbers = #tpu.dot_dimension_numbers<[1], [0], [0], [1], [0, 0, 1, 1], [], []>} : vector<8x8xbf16>, vector<8x8xbf16>, vector<8x8xf32> -> vector<8x8xf32>
    %125 = arith.truncf %124 : vector<8x8xf32> to vector<8x8xbf16>
    %c0_45 = arith.constant 0 : index
    %c24 = arith.constant 24 : index
    %126 = vector.load %arg16[%c0_45, %c24] : memref<8x32xbf16, #tpu.memory_space<vmem>>, vector<8x8xbf16>
    tpu.vector_store %arg16[%c0_45, %c24], %125 {strides = array<i32>} : memref<8x32xbf16, #tpu.memory_space<vmem>>, vector<8x8xbf16>,
    %c0_46 = arith.constant 0 : index
    %c0_47 = arith.constant 0 : index
    %127 = vector.load %arg16[%c0_46, %c0_47] : memref<8x32xbf16, #tpu.memory_space<vmem>>, vector<8x32xbf16>
    %c0_48 = arith.constant 0 : index
    %c0_49 = arith.constant 0 : index
    %c0_50 = arith.constant 0 : index
    %128 = vector.load %arg9[%c0_48, %c0_49, %c0_50] : memref<1x32x32xbf16, #tpu.memory_space<vmem>>, vector<1x32x32xbf16>
    %129 = vector.shape_cast %128 : vector<1x32x32xbf16> to vector<32x32xbf16>
    %cst_51 = arith.constant dense<0.000000e+00> : vector<8x32xf32>
    %130 = tpu.matmul %127, %129, %cst_51 {dimension_numbers = #tpu.dot_dimension_numbers<[1], [0], [0], [1], [0, 0, 1, 1], [], []>} : vector<8x32xbf16>, vector<32x32xbf16>, vector<8x32xf32> -> vector<8x32xf32>
    %131 = arith.addf %3, %130 : vector<8x32xf32>
    %132 = arith.mulf %131, %131 : vector<8x32xf32>
    %cst_52 = arith.constant dense<0.000000e+00> : vector<8xf32>
    %133 = vector.multi_reduction <add>, %132, %cst_52 [1] : vector<8x32xf32> to vector<8xf32>
    %134 = vector.shape_cast %133 : vector<8xf32> to vector<8x1xf32>
    %cst_53 = arith.constant 3.200000e+01 : f32
    %135 = vector.broadcast %cst_53 : f32 to vector<8x1xf32>
    %136 = arith.divf %134, %135 : vector<8x1xf32>
    %cst_54 = arith.constant 9.99999997E-7 : f32
    %137 = vector.broadcast %cst_54 : f32 to vector<8x1xf32>
    %138 = arith.addf %136, %137 : vector<8x1xf32>
    %139 = math.rsqrt %138 : vector<8x1xf32>
    %140 = vector.broadcast %139 : vector<8x1xf32> to vector<8x32xf32>
    %141 = arith.mulf %131, %140 : vector<8x32xf32>
    %c0_55 = arith.constant 0 : index
    %c0_56 = arith.constant 0 : index
    %c0_57 = arith.constant 0 : index
    %142 = vector.load %arg10[%c0_55, %c0_56, %c0_57] : memref<1x1x32xf32, #tpu.memory_space<vmem>>, vector<1x1x32xf32>
    %143 = vector.shape_cast %142 : vector<1x1x32xf32> to vector<32xf32>
    %144 = vector.shape_cast %143 : vector<32xf32> to vector<1x32xf32>
    %145 = vector.broadcast %144 : vector<1x32xf32> to vector<8x32xf32>
    %146 = arith.mulf %141, %145 : vector<8x32xf32>
    %147 = arith.truncf %146 : vector<8x32xf32> to vector<8x32xbf16>
    %c0_58 = arith.constant 0 : index
    %c0_59 = arith.constant 0 : index
    %c0_60 = arith.constant 0 : index
    %148 = vector.load %arg11[%c0_58, %c0_59, %c0_60] : memref<1x32x64xbf16, #tpu.memory_space<vmem>>, vector<1x32x64xbf16>
    %149 = vector.shape_cast %148 : vector<1x32x64xbf16> to vector<32x64xbf16>
    %cst_61 = arith.constant dense<0.000000e+00> : vector<8x64xf32>
    %150 = tpu.matmul %147, %149, %cst_61 {dimension_numbers = #tpu.dot_dimension_numbers<[1], [0], [0], [1], [0, 0, 1, 1], [], []>} : vector<8x32xbf16>, vector<32x64xbf16>, vector<8x64xf32> -> vector<8x64xf32>
    %cst_62 = arith.constant 0.000000e+00 : f32
    %151 = vector.broadcast %cst_62 : f32 to vector<8x64xf32>
    %152 = arith.maximumf %150, %151 : vector<8x64xf32>
    %153 = arith.truncf %152 : vector<8x64xf32> to vector<8x64xbf16>
    %c0_63 = arith.constant 0 : index
    %c0_64 = arith.constant 0 : index
    %c0_65 = arith.constant 0 : index
    %154 = vector.load %arg12[%c0_63, %c0_64, %c0_65] : memref<1x64x32xbf16, #tpu.memory_space<vmem>>, vector<1x64x32xbf16>
    %155 = vector.shape_cast %154 : vector<1x64x32xbf16> to vector<64x32xbf16>
    %cst_66 = arith.constant dense<0.000000e+00> : vector<8x32xf32>
    %156 = tpu.matmul %153, %155, %cst_66 {dimension_numbers = #tpu.dot_dimension_numbers<[1], [0], [0], [1], [0, 0, 1, 1], [], []>} : vector<8x64xbf16>, vector<64x32xbf16>, vector<8x32xf32> -> vector<8x32xf32>
    %157 = arith.addf %131, %156 : vector<8x32xf32>
    %c0_67 = arith.constant 0 : index
    %c0_68 = arith.constant 0 : index
    %158 = vector.load %arg15[%c0_67, %c0_68] : memref<8x32xf32, #tpu.memory_space<vmem>>, vector<8x32xf32>
    tpu.vector_store %arg15[%c0_67, %c0_68], %157 {strides = array<i32>} : memref<8x32xf32, #tpu.memory_space<vmem>>, vector<8x32xf32>,
    %c1_i32 = arith.constant 1 : i32
    %159 = arith.cmpi eq, %arg1, %c1_i32 : i32
    %160 = arith.extui %159 : i1 to i32
    %c0_i32_69 = arith.constant 0 : i32
    %161 = arith.cmpi ne, %160, %c0_i32_69 : i32
    scf.if %161 {
      %162 = arith.mulf %157, %157 : vector<8x32xf32>
      %cst_70 = arith.constant dense<0.000000e+00> : vector<8xf32>
      %163 = vector.multi_reduction <add>, %162, %cst_70 [1] : vector<8x32xf32> to vector<8xf32>
      %164 = vector.shape_cast %163 : vector<8xf32> to vector<8x1xf32>
      %cst_71 = arith.constant 3.200000e+01 : f32
      %165 = vector.broadcast %cst_71 : f32 to vector<8x1xf32>
      %166 = arith.divf %164, %165 : vector<8x1xf32>
      %cst_72 = arith.constant 9.99999997E-7 : f32
      %167 = vector.broadcast %cst_72 : f32 to vector<8x1xf32>
      %168 = arith.addf %166, %167 : vector<8x1xf32>
      %169 = math.rsqrt %168 : vector<8x1xf32>
      %170 = vector.broadcast %169 : vector<8x1xf32> to vector<8x32xf32>
      %171 = arith.mulf %157, %170 : vector<8x32xf32>
      %c0_73 = arith.constant 0 : index
      %c0_74 = arith.constant 0 : index
      %172 = vector.load %arg13[%c0_73, %c0_74] : memref<1x32xf32, #tpu.memory_space<vmem>>, vector<1x32xf32>
      %173 = vector.shape_cast %172 : vector<1x32xf32> to vector<32xf32>
      %174 = vector.shape_cast %173 : vector<32xf32> to vector<1x32xf32>
      %175 = vector.broadcast %174 : vector<1x32xf32> to vector<8x32xf32>
      %176 = arith.mulf %171, %175 : vector<8x32xf32>
      %c0_75 = arith.constant 0 : index
      %c0_76 = arith.constant 0 : index
      %c0_77 = arith.constant 0 : index
      %177 = vector.load %arg14[%c0_75, %c0_76, %c0_77] : memref<1x8x32xf32, #tpu.memory_space<vmem>>, vector<1x8x32xf32>
      %178 = vector.shape_cast %177 : vector<1x8x32xf32> to vector<8x32xf32>
      %179 = vector.shape_cast %176 : vector<8x32xf32> to vector<1x8x32xf32>
      tpu.vector_store %arg14[%c0_75, %c0_76, %c0_77], %179 {strides = array<i32>} : memref<1x8x32xf32, #tpu.memory_space<vmem>>, vector<1x8x32xf32>,
    } else {
    }
    return
  }
  func.func @transform_0(%arg0: i32, %arg1: i32) -> (i32, i32, i32) {
    %c0_i32 = arith.constant 0 : i32
    %c0_i32_0 = arith.constant 0 : i32
    %c0_i32_1 = arith.constant 0 : i32
    return %arg0, %c0_i32, %c0_i32_0 : i32, i32, i32
  }
  func.func @transform_1(%arg0: i32, %arg1: i32) -> (i32, i32, i32) {
    %c0_i32 = arith.constant 0 : i32
    %c0_i32_0 = arith.constant 0 : i32
    %c0_i32_1 = arith.constant 0 : i32
    return %arg0, %c0_i32, %c0_i32_0 : i32, i32, i32
  }
  func.func @transform_2(%arg0: i32, %arg1: i32) -> (i32, i32, i32) {
    %c0_i32 = arith.constant 0 : i32
    %c0_i32_0 = arith.constant 0 : i32
    %c0_i32_1 = arith.constant 0 : i32
    %c0_i32_2 = arith.constant 0 : i32
    return %c0_i32, %c0_i32_0, %c0_i32_1 : i32, i32, i32
  }
  func.func @transform_3(%arg0: i32, %arg1: i32) -> (i32, i32, i32) {
    %c0_i32 = arith.constant 0 : i32
    %c0_i32_0 = arith.constant 0 : i32
    %c0_i32_1 = arith.constant 0 : i32
    return %arg1, %c0_i32, %c0_i32_0 : i32, i32, i32
  }
  func.func @transform_4(%arg0: i32, %arg1: i32) -> (i32, i32, i32) {
    %c0_i32 = arith.constant 0 : i32
    %c0_i32_0 = arith.constant 0 : i32
    %c0_i32_1 = arith.constant 0 : i32
    return %arg1, %c0_i32, %c0_i32_0 : i32, i32, i32
  }
  func.func @transform_5(%arg0: i32, %arg1: i32) -> (i32, i32, i32) {
    %c0_i32 = arith.constant 0 : i32
    %c0_i32_0 = arith.constant 0 : i32
    %c0_i32_1 = arith.constant 0 : i32
    return %arg1, %c0_i32, %c0_i32_0 : i32, i32, i32
  }
  func.func @transform_6(%arg0: i32, %arg1: i32) -> (i32, i32, i32) {
    %c0_i32 = arith.constant 0 : i32
    %c0_i32_0 = arith.constant 0 : i32
    %c0_i32_1 = arith.constant 0 : i32
    return %arg1, %c0_i32, %c0_i32_0 : i32, i32, i32
  }
  func.func @transform_7(%arg0: i32, %arg1: i32) -> (i32, i32, i32) {
    %c0_i32 = arith.constant 0 : i32
    %c0_i32_0 = arith.constant 0 : i32
    %c0_i32_1 = arith.constant 0 : i32
    return %arg1, %c0_i32, %c0_i32_0 : i32, i32, i32
  }
  func.func @transform_8(%arg0: i32, %arg1: i32) -> (i32, i32, i32) {
    %c0_i32 = arith.constant 0 : i32
    %c0_i32_0 = arith.constant 0 : i32
    %c0_i32_1 = arith.constant 0 : i32
    return %arg1, %c0_i32, %c0_i32_0 : i32, i32, i32
  }
  func.func @transform_9(%arg0: i32, %arg1: i32) -> (i32, i32, i32) {
    %c0_i32 = arith.constant 0 : i32
    %c0_i32_0 = arith.constant 0 : i32
    %c0_i32_1 = arith.constant 0 : i32
    return %arg1, %c0_i32, %c0_i32_0 : i32, i32, i32
  }
  func.func @transform_10(%arg0: i32, %arg1: i32) -> (i32, i32, i32) {
    %c0_i32 = arith.constant 0 : i32
    %c0_i32_0 = arith.constant 0 : i32
    %c0_i32_1 = arith.constant 0 : i32
    return %arg1, %c0_i32, %c0_i32_0 : i32, i32, i32
  }
  func.func @transform_11(%arg0: i32, %arg1: i32) -> (i32, i32) {
    %c0_i32 = arith.constant 0 : i32
    %c0_i32_0 = arith.constant 0 : i32
    %c0_i32_1 = arith.constant 0 : i32
    return %c0_i32, %c0_i32_0 : i32, i32
  }
  func.func @transform_12(%arg0: i32, %arg1: i32) -> (i32, i32, i32) {
    %c0_i32 = arith.constant 0 : i32
    %c0_i32_0 = arith.constant 0 : i32
    %c0_i32_1 = arith.constant 0 : i32
    return %arg0, %c0_i32, %c0_i32_0 : i32, i32, i32
  }
}

</mosaic_0001>

<llo_original>
// kernel: tpu_custom_call.1
$region0: #{tpu_custom_call.1}
  #allocation0 [shape = 'u32[]', space=smem, size = 0x4, offset = 0x4, fixed_abs, tag = 'smem constant byte address 0x4 - core index']
  #allocation1 [shape = 'u32[72,128]{1,0:T(1,128)}', space=vmem, size = 0x9000, scoped, tag = 'internal scratch']
  #allocation2 [shape = 'f32[8,32]{1,0:T(8,128)}', space=vmem, size = 0x1000, scoped, tag = 'scratch operand']
  #allocation3 [shape = 'bf16[8,32]{1,0:T(8,128)(2,1)}', space=vmem, size = 0x800, scoped, tag = 'scratch operand']
  %s0 = inlined_call_operand.hbm [shape: bf16[2,8,32], index: 0, kind: input, shape index: {}]
  %s1 = inlined_call_operand.hbm [shape: f32[2,1,8], index: 1, kind: input, shape index: {}]
  %s2 = inlined_call_operand.hbm [shape: bf16[4,8,8], index: 2, kind: input, shape index: {}]
  %s3 = inlined_call_operand.hbm [shape: f32[2,1,32], index: 3, kind: input, shape index: {}]
  %s4 = inlined_call_operand.vmem [shape: bf16[2,32,32], index: 4, kind: input, shape index: {}]
  %s5 = inlined_call_operand.vmem [shape: bf16[2,32,32], index: 5, kind: input, shape index: {}]
  %s6 = inlined_call_operand.vmem [shape: bf16[2,32,32], index: 6, kind: input, shape index: {}]
  %s7 = inlined_call_operand.hbm [shape: bf16[2,32,32], index: 7, kind: input, shape index: {}]
  %s8 = inlined_call_operand.vmem [shape: f32[2,1,32], index: 8, kind: input, shape index: {}]
  %s9 = inlined_call_operand.hbm [shape: bf16[2,32,64], index: 9, kind: input, shape index: {}]
  %s10 = inlined_call_operand.vmem [shape: bf16[2,64,32], index: 10, kind: input, shape index: {}]
  %s11 = inlined_call_operand.vmem [shape: f32[1,32], index: 11, kind: input, shape index: {}]
  %s12 = inlined_call_operand.hbm [shape: f32[2,8,32], index: 12, kind: output, shape index: {}]
  %s13 = sld [smem:[#allocation0]]
  $region113: #{tpu_custom_call.1} parent=0
    _
  %s15 = ssub.s32 1, %s13
  %s16 = scalar_select 0, %s15, %s13
  $region1: #{tpu_custom_call.1} parent=0
    #allocation4 [shape = 'u8[4096]{0}', space=vmem, size = 0x1000, scoped, tag = 'input window, operand 0']
    #allocation5 [shape = 's32[2]{0}', space=sflag, size = 0x8, scoped, tag = 'scoped memory for tpu_custom_call.1']
    #allocation6 [shape = 's32[2]{0}', space=sflag, size = 0x8, scoped, tag = 'scoped memory for tpu_custom_call.1']
    #allocation7 [shape = 'u8[1024]{0}', space=vmem, size = 0x400, scoped, tag = 'input window, operand 1']
    #allocation8 [shape = 's32[2]{0}', space=sflag, size = 0x8, scoped, tag = 'scoped memory for tpu_custom_call.1']
    #allocation9 [shape = 'u8[8192]{0}', space=vmem, size = 0x2000, scoped, tag = 'input window, operand 2, single buffered']
    #allocation10 [shape = 'u8[1024]{0}', space=vmem, size = 0x400, scoped, tag = 'input window, operand 3']
    #allocation11 [shape = 's32[2]{0}', space=sflag, size = 0x8, scoped, tag = 'scoped memory for tpu_custom_call.1']
    #allocation12 [shape = 'u8[16384]{0}', space=vmem, size = 0x4000, scoped, tag = 'input window, operand 7']
    #allocation13 [shape = 'u8[16384]{0}', space=vmem, size = 0x4000, scoped, tag = 'input window, operand 9']
    #allocation14 [shape = 's32[2]{0}', space=sflag, size = 0x8, scoped, tag = 'scoped memory for tpu_custom_call.1']
    #allocation15 [shape = 'u8[8192]{0}', space=vmem, size = 0x2000, scoped, tag = 'output window, operand 0']
    %17 = vsyncpa [#allocation5], 0
    %s18 = scalar_lea.sflag [#allocation5], 1
    %19 = vsyncpa %s18, 0
    %20 = vsyncpa [#allocation8], 0
    %s21 = scalar_lea.sflag [#allocation8], 1
    %22 = vsyncpa %s21, 0
    %23 = vsyncpa [#allocation11], 0
    %s24 = scalar_lea.sflag [#allocation11], 1
    %25 = vsyncpa %s24, 0
    %26 = vsyncpa [#allocation14], 0
    %s27 = scalar_lea.sflag [#allocation14], 1
    %28 = vsyncpa %s27, 0
    %29 = vsyncpa [#allocation6], 0
    %s30 = scalar_lea.sflag [#allocation6], 1
    %31 = vsyncpa %s30, 0
    loop: start=0, step=1, limit=6
    $region2: #{tpu_custom_call.1} parent=1 // loop_pre_header
      _
    $region3: #{tpu_custom_call.1} parent=1 // loop_header
      %s33 = sphi 0, %s37
      %p34 = scmp.ge.s32.totalorder %s33, 6
      %s40 = sphi 0, %s52
      %s41 = sphi 0, %s48
      %s42 = sphi 0, %s40
      %s43 = sphi 0, %s41
      %s44 = sphi 0, %s42
      %s45 = sphi 0, %s43
      %s55 = sphi 0, %s57
      %s58 = sphi 0, %s55
      %s59 = sphi 0, %s58
      %s75 = sphi 0, %s59
      %s81 = sphi 0, %s83
      %s84 = sphi 0, %s81
      %s85 = sphi 0, %s84
      %s101 = sphi 0, %s85
      %s105 = sphi 0, %s105
      %s107 = sphi 0, %s105
      %s108 = sphi 0, %s107
      %s122 = sphi 0, %s108
      %s128 = sphi 0, %s130
      %s131 = sphi 0, %s128
      %s132 = sphi 0, %s131
      %s148 = sphi 0, %s132
      %s154 = sphi 0, %s156
      %s157 = sphi 0, %s154
      %s158 = sphi 0, %s157
      %s174 = sphi 0, %s158
      %s180 = sphi 0, %s182
      %s183 = sphi 0, %s180
      %s184 = sphi 0, %s183
      %s200 = sphi 0, %s184
      %s206 = sphi 0, %s208
      %s209 = sphi 0, %s206
      %s210 = sphi 0, %s209
      %s226 = sphi 0, %s210
      %s232 = sphi 0, %s234
      %s235 = sphi 0, %s232
      %s236 = sphi 0, %s235
      %s252 = sphi 0, %s236
      %s258 = sphi 0, %s260
      %s261 = sphi 0, %s258
      %s262 = sphi 0, %s261
      %s278 = sphi 0, %s262
      %s284 = sphi 0, %s286
      %s287 = sphi 0, %s284
      %s288 = sphi 0, %s287
      %s304 = sphi 0, %s288
      %s310 = sphi 0, %s312
      %s313 = sphi 0, %s310
      %s314 = sphi 0, %s313
      %s330 = sphi 0, %s314
      %s334 = sphi 0, %s334
      %s336 = sphi 0, %s334
      %s337 = sphi 0, %s336
      %s351 = sphi 0, %s337
      %s357 = sphi 0, %s359
      %s360 = sphi 0, %s357
      %s361 = sphi 0, %s360
      %s377 = sphi 0, %s361
    $region4: #{tpu_custom_call.1} parent=1 // loop_header_branch
      %36 = sbr.rel (%p34) target = $region8
    $region5: #{tpu_custom_call.1} parent=1 // loop_body
      %s38 = ssub.s32 %s33, 1
      %s39 = ssub.s32 %s33, 2
      %s46 = sadd.s32 1, %s41
      %p47 = scmp.ge.s32.totalorder %s46, 2
      %s48 = scalar_select %p47, 0, %s46
      %s49 = sadd.s32 1, %s40
      %s50 = scalar_select %p47, %s49, %s40
      %p51 = scmp.ge.s32.totalorder %s50, 2
      %s52 = scalar_select %p51, 0, %s50
      %s53 = ssub.s32 %s40, %s52
      %p54 = scmp.eq.s32.totalorder %s53, 0
      %s56 = sadd.s32 %s55, 1
      %s57 = scalar_select %p54, %s55, %s56
      %p60 = pneg %p54
      %p61 = scmp.eq.s32.totalorder %s33, 3
      %p62 = por %p60, %p61
      %p63 = scmp.ne.s32.totalorder %s55, %s58
      %p64 = scmp.eq.s32.totalorder %s33, 0
      %p65 = por %p63, %p64
      %p66 = scmp.ne.s32.totalorder %s55, %s58
      %p67 = scmp.eq.s32.totalorder %s38, 3
      %p68 = por %p66, %p67
      %p69 = scmp.ne.s32.totalorder %s58, %s59
      %p70 = scmp.eq.s32.totalorder %s38, 0
      %p71 = por %p69, %p70
      %p72 = scmp.ne.s32.totalorder %s58, %s59
      %p73 = scmp.eq.s32.totalorder %s39, 3
      %p74 = por %p72, %p73
      %p76 = scmp.ne.s32.totalorder %s59, %s75
      %p77 = scmp.eq.s32.totalorder %s39, 0
      %p78 = por %p76, %p77
      %s79 = ssub.s32 %s40, %s52
      %p80 = scmp.eq.s32.totalorder %s79, 0
      %s82 = sadd.s32 %s81, 1
      %s83 = scalar_select %p80, %s81, %s82
      %p86 = pneg %p80
      %p87 = scmp.eq.s32.totalorder %s33, 3
      %p88 = por %p86, %p87
      %p89 = scmp.ne.s32.totalorder %s81, %s84
      %p90 = scmp.eq.s32.totalorder %s33, 0
      %p91 = por %p89, %p90
      %p92 = scmp.ne.s32.totalorder %s81, %s84
      %p93 = scmp.eq.s32.totalorder %s38, 3
      %p94 = por %p92, %p93
      %p95 = scmp.ne.s32.totalorder %s84, %s85
      %p96 = scmp.eq.s32.totalorder %s38, 0
      %p97 = por %p95, %p96
      %p98 = scmp.ne.s32.totalorder %s84, %s85
      %p99 = scmp.eq.s32.totalorder %s39, 3
      %p100 = por %p98, %p99
      %p102 = scmp.ne.s32.totalorder %s85, %s101
      %p103 = scmp.eq.s32.totalorder %s39, 0
      %p104 = por %p102, %p103
      %s106 = sadd.s32 %s105, 1
      %p109 = scmp.eq.s32.totalorder %s33, 3
      %p110 = scmp.ne.s32.totalorder %s105, %s107
      %p111 = scmp.eq.s32.totalorder %s33, 0
      %p112 = por %p110, %p111
      %p113 = scmp.ne.s32.totalorder %s105, %s107
      %p114 = scmp.eq.s32.totalorder %s38, 3
      %p115 = por %p113, %p114
      %p116 = scmp.ne.s32.totalorder %s107, %s108
      %p117 = scmp.eq.s32.totalorder %s38, 0
      %p118 = por %p116, %p117
      %p119 = scmp.ne.s32.totalorder %s107, %s108
      %p120 = scmp.eq.s32.totalorder %s39, 3
      %p121 = por %p119, %p120
      %p123 = scmp.ne.s32.totalorder %s108, %s122
      %p124 = scmp.eq.s32.totalorder %s39, 0
      %p125 = por %p123, %p124
      %s126 = ssub.s32 %s41, %s48
      %p127 = scmp.eq.s32.totalorder %s126, 0
      %s129 = sadd.s32 %s128, 1
      %s130 = scalar_select %p127, %s128, %s129
      %p133 = pneg %p127
      %p134 = scmp.eq.s32.totalorder %s33, 3
      %p135 = por %p133, %p134
      %p136 = scmp.ne.s32.totalorder %s128, %s131
      %p137 = scmp.eq.s32.totalorder %s33, 0
      %p138 = por %p136, %p137
      %p139 = scmp.ne.s32.totalorder %s128, %s131
      %p140 = scmp.eq.s32.totalorder %s38, 3
      %p141 = por %p139, %p140
      %p142 = scmp.ne.s32.totalorder %s131, %s132
      %p143 = scmp.eq.s32.totalorder %s38, 0
      %p144 = por %p142, %p143
      %p145 = scmp.ne.s32.totalorder %s131, %s132
      %p146 = scmp.eq.s32.totalorder %s39, 3
      %p147 = por %p145, %p146
      %p149 = scmp.ne.s32.totalorder %s132, %s148
      %p150 = scmp.eq.s32.totalorder %s39, 0
      %p151 = por %p149, %p150
      %s152 = ssub.s32 %s41, %s48
      %p153 = scmp.eq.s32.totalorder %s152, 0
      %s155 = sadd.s32 %s154, 1
      %s156 = scalar_select %p153, %s154, %s155
      %p159 = pneg %p153
      %p160 = scmp.eq.s32.totalorder %s33, 3
      %p161 = por %p159, %p160
      %p162 = scmp.ne.s32.totalorder %s154, %s157
      %p163 = scmp.eq.s32.totalorder %s33, 0
      %p164 = por %p162, %p163
      %p165 = scmp.ne.s32.totalorder %s154, %s157
      %p166 = scmp.eq.s32.totalorder %s38, 3
      %p167 = por %p165, %p166
      %p168 = scmp.ne.s32.totalorder %s157, %s158
      %p169 = scmp.eq.s32.totalorder %s38, 0
      %p170 = por %p168, %p169
      %p171 = scmp.ne.s32.totalorder %s157, %s158
      %p172 = scmp.eq.s32.totalorder %s39, 3
      %p173 = por %p171, %p172
      %p175 = scmp.ne.s32.totalorder %s158, %s174
      %p176 = scmp.eq.s32.totalorder %s39, 0
      %p177 = por %p175, %p176
      %s178 = ssub.s32 %s41, %s48
      %p179 = scmp.eq.s32.totalorder %s178, 0
      %s181 = sadd.s32 %s180, 1
      %s182 = scalar_select %p179, %s180, %s181
      %p185 = pneg %p179
      %p186 = scmp.eq.s32.totalorder %s33, 3
      %p187 = por %p185, %p186
      %p188 = scmp.ne.s32.totalorder %s180, %s183
      %p189 = scmp.eq.s32.totalorder %s33, 0
      %p190 = por %p188, %p189
      %p191 = scmp.ne.s32.totalorder %s180, %s183
      %p192 = scmp.eq.s32.totalorder %s38, 3
      %p193 = por %p191, %p192
      %p194 = scmp.ne.s32.totalorder %s183, %s184
      %p195 = scmp.eq.s32.totalorder %s38, 0
      %p196 = por %p194, %p195
      %p197 = scmp.ne.s32.totalorder %s183, %s184
      %p198 = scmp.eq.s32.totalorder %s39, 3
      %p199 = por %p197, %p198
      %p201 = scmp.ne.s32.totalorder %s184, %s200
      %p202 = scmp.eq.s32.totalorder %s39, 0
      %p203 = por %p201, %p202
      %s204 = ssub.s32 %s41, %s48
      %p205 = scmp.eq.s32.totalorder %s204, 0
      %s207 = sadd.s32 %s206, 1
      %s208 = scalar_select %p205, %s206, %s207
      %p211 = pneg %p205
      %p212 = scmp.eq.s32.totalorder %s33, 3
      %p213 = por %p211, %p212
      %p214 = scmp.ne.s32.totalorder %s206, %s209
      %p215 = scmp.eq.s32.totalorder %s33, 0
      %p216 = por %p214, %p215
      %p217 = scmp.ne.s32.totalorder %s206, %s209
      %p218 = scmp.eq.s32.totalorder %s38, 3
      %p219 = por %p217, %p218
      %p220 = scmp.ne.s32.totalorder %s209, %s210
      %p221 = scmp.eq.s32.totalorder %s38, 0
      %p222 = por %p220, %p221
      %p223 = scmp.ne.s32.totalorder %s209, %s210
      %p224 = scmp.eq.s32.totalorder %s39, 3
      %p225 = por %p223, %p224
      %p227 = scmp.ne.s32.totalorder %s210, %s226
      %p228 = scmp.eq.s32.totalorder %s39, 0
      %p229 = por %p227, %p228
      %s230 = ssub.s32 %s41, %s48
      %p231 = scmp.eq.s32.totalorder %s230, 0
      %s233 = sadd.s32 %s232, 1
      %s234 = scalar_select %p231, %s232, %s233
      %p237 = pneg %p231
      %p238 = scmp.eq.s32.totalorder %s33, 3
      %p239 = por %p237, %p238
      %p240 = scmp.ne.s32.totalorder %s232, %s235
      %p241 = scmp.eq.s32.totalorder %s33, 0
      %p242 = por %p240, %p241
      %p243 = scmp.ne.s32.totalorder %s232, %s235
      %p244 = scmp.eq.s32.totalorder %s38, 3
      %p245 = por %p243, %p244
      %p246 = scmp.ne.s32.totalorder %s235, %s236
      %p247 = scmp.eq.s32.totalorder %s38, 0
      %p248 = por %p246, %p247
      %p249 = scmp.ne.s32.totalorder %s235, %s236
      %p250 = scmp.eq.s32.totalorder %s39, 3
      %p251 = por %p249, %p250
      %p253 = scmp.ne.s32.totalorder %s236, %s252
      %p254 = scmp.eq.s32.totalorder %s39, 0
      %p255 = por %p253, %p254
      %s256 = ssub.s32 %s41, %s48
      %p257 = scmp.eq.s32.totalorder %s256, 0
      %s259 = sadd.s32 %s258, 1
      %s260 = scalar_select %p257, %s258, %s259
      %p263 = pneg %p257
      %p264 = scmp.eq.s32.totalorder %s33, 3
      %p265 = por %p263, %p264
      %p266 = scmp.ne.s32.totalorder %s258, %s261
      %p267 = scmp.eq.s32.totalorder %s33, 0
      %p268 = por %p266, %p267
      %p269 = scmp.ne.s32.totalorder %s258, %s261
      %p270 = scmp.eq.s32.totalorder %s38, 3
      %p271 = por %p269, %p270
      %p272 = scmp.ne.s32.totalorder %s261, %s262
      %p273 = scmp.eq.s32.totalorder %s38, 0
      %p274 = por %p272, %p273
      %p275 = scmp.ne.s32.totalorder %s261, %s262
      %p276 = scmp.eq.s32.totalorder %s39, 3
      %p277 = por %p275, %p276
      %p279 = scmp.ne.s32.totalorder %s262, %s278
      %p280 = scmp.eq.s32.totalorder %s39, 0
      %p281 = por %p279, %p280
      %s282 = ssub.s32 %s41, %s48
      %p283 = scmp.eq.s32.totalorder %s282, 0
      %s285 = sadd.s32 %s284, 1
      %s286 = scalar_select %p283, %s284, %s285
      %p289 = pneg %p283
      %p290 = scmp.eq.s32.totalorder %s33, 3
      %p291 = por %p289, %p290
      %p292 = scmp.ne.s32.totalorder %s284, %s287
      %p293 = scmp.eq.s32.totalorder %s33, 0
      %p294 = por %p292, %p293
      %p295 = scmp.ne.s32.totalorder %s284, %s287
      %p296 = scmp.eq.s32.totalorder %s38, 3
      %p297 = por %p295, %p296
      %p298 = scmp.ne.s32.totalorder %s287, %s288
      %p299 = scmp.eq.s32.totalorder %s38, 0
      %p300 = por %p298, %p299
      %p301 = scmp.ne.s32.totalorder %s287, %s288
      %p302 = scmp.eq.s32.totalorder %s39, 3
      %p303 = por %p301, %p302
      %p305 = scmp.ne.s32.totalorder %s288, %s304
      %p306 = scmp.eq.s32.totalorder %s39, 0
      %p307 = por %p305, %p306
      %s308 = ssub.s32 %s41, %s48
      %p309 = scmp.eq.s32.totalorder %s308, 0
      %s311 = sadd.s32 %s310, 1
      %s312 = scalar_select %p309, %s310, %s311
      %p315 = pneg %p309
      %p316 = scmp.eq.s32.totalorder %s33, 3
      %p317 = por %p315, %p316
      %p318 = scmp.ne.s32.totalorder %s310, %s313
      %p319 = scmp.eq.s32.totalorder %s33, 0
      %p320 = por %p318, %p319
      %p321 = scmp.ne.s32.totalorder %s310, %s313
      %p322 = scmp.eq.s32.totalorder %s38, 3
      %p323 = por %p321, %p322
      %p324 = scmp.ne.s32.totalorder %s313, %s314
      %p325 = scmp.eq.s32.totalorder %s38, 0
      %p326 = por %p324, %p325
      %p327 = scmp.ne.s32.totalorder %s313, %s314
      %p328 = scmp.eq.s32.totalorder %s39, 3
      %p329 = por %p327, %p328
      %p331 = scmp.ne.s32.totalorder %s314, %s330
      %p332 = scmp.eq.s32.totalorder %s39, 0
      %p333 = por %p331, %p332
      %s335 = sadd.s32 %s334, 1
      %p338 = scmp.eq.s32.totalorder %s33, 3
      %p339 = scmp.ne.s32.totalorder %s334, %s336
      %p340 = scmp.eq.s32.totalorder %s33, 0
      %p341 = por %p339, %p340
      %p342 = scmp.ne.s32.totalorder %s334, %s336
      %p343 = scmp.eq.s32.totalorder %s38, 3
      %p344 = por %p342, %p343
      %p345 = scmp.ne.s32.totalorder %s336, %s337
      %p346 = scmp.eq.s32.totalorder %s38, 0
      %p347 = por %p345, %p346
      %p348 = scmp.ne.s32.totalorder %s336, %s337
      %p349 = scmp.eq.s32.totalorder %s39, 3
      %p350 = por %p348, %p349
      %p352 = scmp.ne.s32.totalorder %s337, %s351
      %p353 = scmp.eq.s32.totalorder %s39, 0
      %p354 = por %p352, %p353
      %s355 = ssub.s32 %s40, %s52
      %p356 = scmp.eq.s32.totalorder %s355, 0
      %s358 = sadd.s32 %s357, 1
      %s359 = scalar_select %p356, %s357, %s358
      %p362 = pneg %p356
      %p363 = scmp.eq.s32.totalorder %s33, 3
      %p364 = por %p362, %p363
      %p365 = scmp.ne.s32.totalorder %s357, %s360
      %p366 = scmp.eq.s32.totalorder %s33, 0
      %p367 = por %p365, %p366
      %p368 = scmp.ne.s32.totalorder %s357, %s360
      %p369 = scmp.eq.s32.totalorder %s38, 3
      %p370 = por %p368, %p369
      %p371 = scmp.ne.s32.totalorder %s360, %s361
      %p372 = scmp.eq.s32.totalorder %s38, 0
      %p373 = por %p371, %p372
      %p374 = scmp.ne.s32.totalorder %s360, %s361
      %p375 = scmp.eq.s32.totalorder %s39, 3
      %p376 = por %p374, %p375
      %p378 = scmp.ne.s32.totalorder %s361, %s377
      %p379 = scmp.eq.s32.totalorder %s39, 0
      %p380 = por %p378, %p379
      %p381 = scmp.le.s32.totalorder 1, %s33
      %p382 = scmp.lt.s32.totalorder %s33, 5
      %p383 = pnand %p381, %p382
      %p384 = pneg %p383
      // Predicated region
      $region9: #{tpu_custom_call.1} parent=5 // pred_check
        _
      $region10: #{tpu_custom_call.1} parent=5 // pred_check_branch
        %386 = sbr.rel (%p383) target = $region12
      $region11: #{tpu_custom_call.1} parent=5 // pred_region
        %s387 = ssub.s32 %s33, 1
        // Predicated region
        $region13: #{tpu_custom_call.1} parent=11 // pred_check
          %p388 = pneg %p118
        $region14: #{tpu_custom_call.1} parent=11 // pred_check_branch
          %390 = sbr.rel (%p388) target = $region16
        $region15: #{tpu_custom_call.1} parent=11 // pred_region
          %392 = vsyncadd [#allocation8], 0
          %s393 = sshll.u32 %s2, 4
          %s394 = int_to_ptr.hbm [resolvable:$true] %s393
          %s395 = sshll.u32 [#allocation9], 4
          %s396 = int_to_ptr.vmem [resolvable:$true] %s395
          %401 = dma.hbm_to_vmem [thread:$0]  %s394, 256, %s396, [#allocation8], 64, 64, 4
        $region16: #{tpu_custom_call.1} parent=11 // pred_fallthru
          _
        // Predicated region
        $region17: #{tpu_custom_call.1} parent=11 // pred_check
          %p402 = pneg %p347
        $region18: #{tpu_custom_call.1} parent=11 // pred_check_branch
          %404 = sbr.rel (%p402) target = $region20
        $region19: #{tpu_custom_call.1} parent=11 // pred_region
          _
        $region20: #{tpu_custom_call.1} parent=11 // pred_fallthru
          _
      $region12: #{tpu_custom_call.1} parent=5 // pred_fallthru
        _
      %p405 = scmp.lt.s32.totalorder %s33, 4
      // Predicated region
      $region21: #{tpu_custom_call.1} parent=5 // pred_check
        %p406 = pneg %p405
      $region22: #{tpu_custom_call.1} parent=5 // pred_check_branch
        %408 = sbr.rel (%p406) target = $region24
      $region23: #{tpu_custom_call.1} parent=5 // pred_region
        // Predicated region
        $region25: #{tpu_custom_call.1} parent=23 // pred_check
          %p409 = pneg %p65
        $region26: #{tpu_custom_call.1} parent=23 // pred_check_branch
          %411 = sbr.rel (%p409) target = $region28
        $region27: #{tpu_custom_call.1} parent=23 // pred_region
          %s412 = sand.u32 %s55, 1
          %s413 = scalar_lea.sflag [#allocation5], %s412
          %s414 = sand.u32 %s55, 1
          %s415 = smul.addr %s414, 4
          %s416 = scalar_lea.vmem [#allocation4], %s415
          %418 = vsyncadd %s413, 0
          %s419 = smul.addr %s40, 4
          %s420 = scalar_lea.hbm %s0, %s419
          %s422 = sshll.u32 %s420, 4
          %s423 = int_to_ptr.hbm [resolvable:$true] %s422
          %s424 = sshll.u32 %s416, 4
          %s425 = int_to_ptr.vmem [resolvable:$true] %s424
          %427 = dma.hbm_to_vmem [thread:$0]  %s423, 64, %s425, %s413
        $region28: #{tpu_custom_call.1} parent=23 // pred_fallthru
          _
        // Predicated region
        $region29: #{tpu_custom_call.1} parent=23 // pred_check
          %p428 = pneg %p91
        $region30: #{tpu_custom_call.1} parent=23 // pred_check_branch
          %430 = sbr.rel (%p428) target = $region32
        $region31: #{tpu_custom_call.1} parent=23 // pred_region
          %s431 = sand.u32 %s33, 1
          %s432 = scalar_lea.sflag [#allocation8], %s431
          %s433 = sand.u32 %s81, 1
          %s434 = scalar_lea.vmem [#allocation7], %s433
          %436 = vsyncadd %s432, 0
          %s437 = scalar_lea.hbm %s1, %s40
          %s439 = sshll.u32 %s437, 4
          %s440 = int_to_ptr.hbm [resolvable:$true] %s439
          %s441 = sshll.u32 %s434, 4
          %s442 = int_to_ptr.vmem [resolvable:$true] %s441
          %444 = dma.hbm_to_vmem [thread:$0]  %s440, 16, %s442, %s432
        $region32: #{tpu_custom_call.1} parent=23 // pred_fallthru
          _
        // Predicated region
        $region33: #{tpu_custom_call.1} parent=23 // pred_check
          %p445 = pneg %p138
        $region34: #{tpu_custom_call.1} parent=23 // pred_check_branch
          %447 = sbr.rel (%p445) target = $region36
        $region35: #{tpu_custom_call.1} parent=23 // pred_region
          %s448 = sand.u32 %s33, 1
          %s449 = scalar_lea.sflag [#allocation11], %s448
          %s450 = sand.u32 %s128, 1
          %s451 = scalar_lea.vmem [#allocation10], %s450
          %453 = vsyncadd %s449, 0
          %s454 = scalar_lea.hbm %s3, %s41
          %s456 = sshll.u32 %s454, 4
          %s457 = int_to_ptr.hbm [resolvable:$true] %s456
          %s458 = sshll.u32 %s451, 4
          %s459 = int_to_ptr.vmem [resolvable:$true] %s458
          %461 = dma.hbm_to_vmem [thread:$0]  %s457, 16, %s459, %s449
        $region36: #{tpu_custom_call.1} parent=23 // pred_fallthru
          _
        // Predicated region
        $region37: #{tpu_custom_call.1} parent=23 // pred_check
          %p462 = pneg %p164
        $region38: #{tpu_custom_call.1} parent=23 // pred_check_branch
          %464 = sbr.rel (%p462) target = $region40
        $region39: #{tpu_custom_call.1} parent=23 // pred_region
          %p465 = scmp.lt.s32.totalorder %s41, 1
          %s466 = scalar_select %p465, %s41, 1
          %s467 = smul.addr %s466, 4
          %s468 = smul.addr %s467, 4
          %s469 = scalar_lea.vmem %s4, %s468
        $region40: #{tpu_custom_call.1} parent=23 // pred_fallthru
          _
        // Predicated region
        $region41: #{tpu_custom_call.1} parent=23 // pred_check
          %p470 = pneg %p190
        $region42: #{tpu_custom_call.1} parent=23 // pred_check_branch
          %472 = sbr.rel (%p470) target = $region44
        $region43: #{tpu_custom_call.1} parent=23 // pred_region
          %p473 = scmp.lt.s32.totalorder %s41, 1
          %s474 = scalar_select %p473, %s41, 1
          %s475 = smul.addr %s474, 4
          %s476 = smul.addr %s475, 4
          %s477 = scalar_lea.vmem %s5, %s476
        $region44: #{tpu_custom_call.1} parent=23 // pred_fallthru
          _
        // Predicated region
        $region45: #{tpu_custom_call.1} parent=23 // pred_check
          %p478 = pneg %p216
        $region46: #{tpu_custom_call.1} parent=23 // pred_check_branch
          %480 = sbr.rel (%p478) target = $region48
        $region47: #{tpu_custom_call.1} parent=23 // pred_region
          %p481 = scmp.lt.s32.totalorder %s41, 1
          %s482 = scalar_select %p481, %s41, 1
          %s483 = smul.addr %s482, 4
          %s484 = smul.addr %s483, 4
          %s485 = scalar_lea.vmem %s6, %s484
        $region48: #{tpu_custom_call.1} parent=23 // pred_fallthru
          _
        // Predicated region
        $region49: #{tpu_custom_call.1} parent=23 // pred_check
          %p486 = pneg %p242
        $region50: #{tpu_custom_call.1} parent=23 // pred_check_branch
          %488 = sbr.rel (%p486) target = $region52
        $region51: #{tpu_custom_call.1} parent=23 // pred_region
          %s489 = sand.u32 %s33, 1
          %s490 = scalar_lea.sflag [#allocation11], %s489
          %s491 = sand.u32 %s232, 1
          %s492 = smul.addr %s491, 16
          %s493 = scalar_lea.vmem [#allocation12], %s492
          %495 = vsyncadd %s490, 0
          %s496 = smul.addr %s41, 4
          %s497 = smul.addr %s496, 4
          %s498 = scalar_lea.hbm %s7, %s497
          %s499 = sshll.u32 %s498, 4
          %s500 = int_to_ptr.hbm [resolvable:$true] %s499
          %s501 = sshll.u32 %s493, 4
          %s502 = int_to_ptr.vmem [resolvable:$true] %s501
          %507 = dma.hbm_to_vmem [thread:$0]  %s500, 256, %s502, %s490, 64, 64, 4
        $region52: #{tpu_custom_call.1} parent=23 // pred_fallthru
          _
        // Predicated region
        $region53: #{tpu_custom_call.1} parent=23 // pred_check
          %p508 = pneg %p268
        $region54: #{tpu_custom_call.1} parent=23 // pred_check_branch
          %510 = sbr.rel (%p508) target = $region56
        $region55: #{tpu_custom_call.1} parent=23 // pred_region
          %p511 = scmp.lt.s32.totalorder %s41, 1
          %s512 = scalar_select %p511, %s41, 1
          %s513 = scalar_lea.vmem %s8, %s512
        $region56: #{tpu_custom_call.1} parent=23 // pred_fallthru
          _
        // Predicated region
        $region57: #{tpu_custom_call.1} parent=23 // pred_check
          %p514 = pneg %p294
        $region58: #{tpu_custom_call.1} parent=23 // pred_check_branch
          %516 = sbr.rel (%p514) target = $region60
        $region59: #{tpu_custom_call.1} parent=23 // pred_region
          %s517 = sand.u32 %s284, 1
          %s518 = scalar_lea.sflag [#allocation14], %s517
          %s519 = sand.u32 %s284, 1
          %s520 = smul.addr %s519, 16
          %s521 = scalar_lea.vmem [#allocation13], %s520
          %523 = vsyncadd %s518, 0
          %s524 = smul.addr %s41, 4
          %s525 = smul.addr %s524, 4
          %s526 = scalar_lea.hbm %s9, %s525
          %s527 = sshll.u32 %s526, 4
          %s528 = int_to_ptr.hbm [resolvable:$true] %s527
          %s529 = sshll.u32 %s521, 4
          %s530 = int_to_ptr.vmem [resolvable:$true] %s529
          %535 = dma.hbm_to_vmem [thread:$0]  %s528, 256, %s530, %s518, 64, 64, 4
        $region60: #{tpu_custom_call.1} parent=23 // pred_fallthru
          _
        // Predicated region
        $region61: #{tpu_custom_call.1} parent=23 // pred_check
          %p536 = pneg %p320
        $region62: #{tpu_custom_call.1} parent=23 // pred_check_branch
          %538 = sbr.rel (%p536) target = $region64
        $region63: #{tpu_custom_call.1} parent=23 // pred_region
          %p539 = scmp.lt.s32.totalorder %s41, 1
          %s540 = scalar_select %p539, %s41, 1
          %s541 = smul.addr %s540, 8
          %s542 = smul.addr %s541, 4
          %s543 = scalar_lea.vmem %s10, %s542
        $region64: #{tpu_custom_call.1} parent=23 // pred_fallthru
          _
      $region24: #{tpu_custom_call.1} parent=5 // pred_fallthru
        _
      %p544 = scmp.le.s32.totalorder 1, %s33
      %p545 = scmp.lt.s32.totalorder %s33, 5
      %p546 = pnand %p544, %p545
      %p547 = pneg %p546
      // Predicated region
      $region65: #{tpu_custom_call.1} parent=5 // pred_check
        _
      $region66: #{tpu_custom_call.1} parent=5 // pred_check_branch
        %549 = sbr.rel (%p546) target = $region68
      $region67: #{tpu_custom_call.1} parent=5 // pred_region
        %s550 = ssub.s32 %s33, 1
        %s551 = sand.u32 %s58, 1
        %s552 = scalar_lea.sflag [#allocation5], %s551
        %s553 = sand.u32 %s58, 1
        %s554 = smul.addr %s553, 4
        %s555 = scalar_lea.vmem [#allocation4], %s554
        // Predicated region
        $region69: #{tpu_custom_call.1} parent=67 // pred_check
          %p556 = pneg %p71
        $region70: #{tpu_custom_call.1} parent=67 // pred_check_branch
          %558 = sbr.rel (%p556) target = $region72
        $region71: #{tpu_custom_call.1} parent=67 // pred_region
          %560 = dma.done %s552, 64
        $region72: #{tpu_custom_call.1} parent=67 // pred_fallthru
          _
        %s561 = sand.u32 %s38, 1
        %s562 = scalar_lea.sflag [#allocation8], %s561
        %s563 = sand.u32 %s84, 1
        %s564 = scalar_lea.vmem [#allocation7], %s563
        // Predicated region
        $region73: #{tpu_custom_call.1} parent=67 // pred_check
          %p565 = pneg %p97
        $region74: #{tpu_custom_call.1} parent=67 // pred_check_branch
          %567 = sbr.rel (%p565) target = $region76
        $region75: #{tpu_custom_call.1} parent=67 // pred_region
          %569 = dma.done %s562, 16
        $region76: #{tpu_custom_call.1} parent=67 // pred_fallthru
          _
        // Predicated region
        $region77: #{tpu_custom_call.1} parent=67 // pred_check
          %p570 = pneg %p118
        $region78: #{tpu_custom_call.1} parent=67 // pred_check_branch
          %572 = sbr.rel (%p570) target = $region80
        $region79: #{tpu_custom_call.1} parent=67 // pred_region
          %574 = dma.done [#allocation8], 256
        $region80: #{tpu_custom_call.1} parent=67 // pred_fallthru
          _
        %s575 = sand.u32 %s38, 1
        %s576 = scalar_lea.sflag [#allocation11], %s575
        %s577 = sand.u32 %s131, 1
        %s578 = scalar_lea.vmem [#allocation10], %s577
        // Predicated region
        $region81: #{tpu_custom_call.1} parent=67 // pred_check
          %p579 = pneg %p144
        $region82: #{tpu_custom_call.1} parent=67 // pred_check_branch
          %581 = sbr.rel (%p579) target = $region84
        $region83: #{tpu_custom_call.1} parent=67 // pred_region
          %583 = dma.done %s576, 16
        $region84: #{tpu_custom_call.1} parent=67 // pred_fallthru
          _
        %s584 = sand.u32 %s38, 1
        %s585 = scalar_lea.sflag [#allocation11], %s584
        %s586 = sand.u32 %s235, 1
        %s587 = smul.addr %s586, 16
        %s588 = scalar_lea.vmem [#allocation12], %s587
        // Predicated region
        $region85: #{tpu_custom_call.1} parent=67 // pred_check
          %p589 = pneg %p248
        $region86: #{tpu_custom_call.1} parent=67 // pred_check_branch
          %591 = sbr.rel (%p589) target = $region88
        $region87: #{tpu_custom_call.1} parent=67 // pred_region
          %593 = dma.done %s585, 256
        $region88: #{tpu_custom_call.1} parent=67 // pred_fallthru
          _
        %s594 = sand.u32 %s287, 1
        %s595 = scalar_lea.sflag [#allocation14], %s594
        %s596 = sand.u32 %s287, 1
        %s597 = smul.addr %s596, 16
        %s598 = scalar_lea.vmem [#allocation13], %s597
        // Predicated region
        $region89: #{tpu_custom_call.1} parent=67 // pred_check
          %p599 = pneg %p300
        $region90: #{tpu_custom_call.1} parent=67 // pred_check_branch
          %601 = sbr.rel (%p599) target = $region92
        $region91: #{tpu_custom_call.1} parent=67 // pred_region
          %603 = dma.done %s595, 256
        $region92: #{tpu_custom_call.1} parent=67 // pred_fallthru
          _
        %s604 = sand.u32 %s58, 1
        %s605 = scalar_lea.sflag [#allocation5], %s604
        %s606 = sand.u32 %s58, 1
        %s607 = smul.addr %s606, 4
        %s608 = scalar_lea.vmem [#allocation4], %s607
        %p609 = pneg %p71
        %p610 = pneg %p68
        %s611 = sand.u32 %s38, 1
        %s612 = scalar_lea.sflag [#allocation8], %s611
        %s613 = sand.u32 %s84, 1
        %s614 = scalar_lea.vmem [#allocation7], %s613
        %p615 = pneg %p97
        %p616 = pneg %p94
        %p617 = pneg %p118
        %p618 = pneg %p115
        %s619 = sand.u32 %s38, 1
        %s620 = scalar_lea.sflag [#allocation11], %s619
        %s621 = sand.u32 %s131, 1
        %s622 = scalar_lea.vmem [#allocation10], %s621
        %p623 = pneg %p144
        %p624 = pneg %p141
        %p625 = scmp.lt.s32.totalorder %s43, 1
        %s626 = scalar_select %p625, %s43, 1
        %s627 = smul.addr %s626, 4
        %s628 = smul.addr %s627, 4
        %s629 = scalar_lea.vmem %s4, %s628
        %p630 = pneg %p170
        %p631 = pneg %p167
        %p632 = scmp.lt.s32.totalorder %s43, 1
        %s633 = scalar_select %p632, %s43, 1
        %s634 = smul.addr %s633, 4
        %s635 = smul.addr %s634, 4
        %s636 = scalar_lea.vmem %s5, %s635
        %p637 = pneg %p196
        %p638 = pneg %p193
        %p639 = scmp.lt.s32.totalorder %s43, 1
        %s640 = scalar_select %p639, %s43, 1
        %s641 = smul.addr %s640, 4
        %s642 = smul.addr %s641, 4
        %s643 = scalar_lea.vmem %s6, %s642
        %p644 = pneg %p222
        %p645 = pneg %p219
        %s646 = sand.u32 %s38, 1
        %s647 = scalar_lea.sflag [#allocation11], %s646
        %s648 = sand.u32 %s235, 1
        %s649 = smul.addr %s648, 16
        %s650 = scalar_lea.vmem [#allocation12], %s649
        %p651 = pneg %p248
        %p652 = pneg %p245
        %p653 = scmp.lt.s32.totalorder %s43, 1
        %s654 = scalar_select %p653, %s43, 1
        %s655 = scalar_lea.vmem %s8, %s654
        %p656 = pneg %p274
        %p657 = pneg %p271
        %s658 = sand.u32 %s287, 1
        %s659 = scalar_lea.sflag [#allocation14], %s658
        %s660 = sand.u32 %s287, 1
        %s661 = smul.addr %s660, 16
        %s662 = scalar_lea.vmem [#allocation13], %s661
        %p663 = pneg %p300
        %p664 = pneg %p297
        %p665 = scmp.lt.s32.totalorder %s43, 1
        %s666 = scalar_select %p665, %s43, 1
        %s667 = smul.addr %s666, 8
        %s668 = smul.addr %s667, 4
        %s669 = scalar_lea.vmem %s10, %s668
        %p670 = pneg %p326
        %p671 = pneg %p323
        %p672 = pneg %p347
        %p673 = pneg %p344
        %p674 = pneg %p373
        %p675 = pneg %p370
        %s676 = sand.u32 %s360, 1
        %s677 = scalar_lea.sflag [#allocation6], %s676
        %s678 = sand.u32 %s360, 1
        %s679 = smul.addr %s678, 8
        %s680 = scalar_lea.vmem [#allocation15], %s679
        %p681 = scmp.lt.s32.totalorder %s43, 1
        %s682 = scalar_select %p681, %s43, 1
        %s683 = smul.addr %s682, 4
        %s684 = smul.addr %s683, 4
        %s685 = scalar_lea.vmem %s4, %s684
        %p686 = scmp.lt.s32.totalorder %s43, 1
        %s687 = scalar_select %p686, %s43, 1
        %s688 = smul.addr %s687, 4
        %s689 = smul.addr %s688, 4
        %s690 = scalar_lea.vmem %s5, %s689
        %p691 = scmp.lt.s32.totalorder %s43, 1
        %s692 = scalar_select %p691, %s43, 1
        %s693 = smul.addr %s692, 4
        %s694 = smul.addr %s693, 4
        %s695 = scalar_lea.vmem %s6, %s694
        %p696 = scmp.lt.s32.totalorder %s43, 1
        %s697 = scalar_select %p696, %s43, 1
        %s698 = scalar_lea.vmem %s8, %s697
        %p699 = scmp.lt.s32.totalorder %s43, 1
        %s700 = scalar_select %p699, %s43, 1
        %s701 = smul.addr %s700, 8
        %s702 = smul.addr %s701, 4
        %s703 = scalar_lea.vmem %s10, %s702
        %p705 = scmp.eq.s32.totalorder %s43, 0
        // Predicated region
        $region93: #{tpu_custom_call.1} parent=67 // pred_check
          %p706 = pneg %p705
        $region94: #{tpu_custom_call.1} parent=67 // pred_check_branch
          %708 = sbr.rel (%p706) target = $region96
        $region95: #{tpu_custom_call.1} parent=67 // pred_region
          %v709 = vld [vmem:[%s555] sm:$0xf]
          %v710 = vunpack.c.l.bf16 %v709
          %vm711 = vcmask 261120
          %712 = vst.msk [vmem:[#allocation2] sm:$0xff] %vm711, %v710
        $region96: #{tpu_custom_call.1} parent=67 // pred_fallthru
          _
        %v713 = vld [vmem:[#allocation2] sm:$0xff]
        %v714 = vld [vmem:[#allocation9] sm:$0xf]
        %v715 = vld [vmem:[#allocation9 + $0x4] sm:$0xf]
        %v716 = vld [vmem:[#allocation9 + $0x8] sm:$0xf]
        %v717 = vld [vmem:[#allocation9 + $0xc] sm:$0xf]
        %v718 = vunpack.c.l.bf16 %v714
        %v719 = vunpack.c.l.bf16 %v715
        %v720 = vunpack.c.l.bf16 %v716
        %v721 = vunpack.c.l.bf16 %v717
        %v722 = vld [vmem:[%s564] sm:$0x1]
        %v724 = vperm.slane %v722, 0
        %v726 = vadd.f32 %v718, %v724
        %v727 = vadd.f32 %v719, %v724
        %v728 = vadd.f32 %v720, %v724
        %v729 = vadd.f32 %v721, %v724
        %v730 = vmul.f32 %v713, %v713
        %vm731 = vcmask 261120
        %v732 = vsel %vm731, %v730, 0.0
        %733 = vadd.xlane.f32.xlu0 %v732
        %v734 = vpop.xlane.xlu0 %733
        %v735 = vrcp.pop 32.0
        %v736 = vmul.f32 32.0, %v735
        %v737 = vsub.f32 1.0, %v736
        %v738 = vmul.f32 %v735, %v737
        %v739 = vadd.f32 %v735, %v738
        %vm740 = vweird.f32 %v735
        %v741 = vsel %vm740, %v735, %v739
        %v742 = vmul.f32 %v734, %v741
        %v743 = vadd.f32 %v742, 1e-06
        %v744 = vrsqrt.pop %v743
        %v745 = vmul.f32 %v744, %v743
        %v746 = vmul.f32 %v745, %v744
        %v747 = vmul.f32 0.5, %v746
        %v748 = vsub.f32 1.5, %v747
        %v749 = vmul.f32 %v744, %v748
        %vm750 = vweird.f32 %v743
        %vm751 = vweird.f32 %v744
        %vm752 = vmor %vm750, %vm751
        %v753 = vsel %vm752, %v744, %v749
        %v754 = vmul.f32 %v713, %v753
        %v755 = vld [vmem:[%s578] sm:$0x1]
        %v757 = vperm.slane %v755, 0
        %v759 = vmul.f32 %v754, %v757
        %v760 = vpack.c.bf16 %v759, %v759
        %v761 = vld [vmem:[%s685] sm:$0xf]
        %v762 = vld [vmem:[%s685 + $0x4] sm:$0xf]
        %v763 = vld [vmem:[%s685 + $0x8] sm:$0xf]
        %v764 = vld [vmem:[%s685 + $0xc] sm:$0xf]
        %v769 = vunpack.c.l.b16 %v761
        %v770 = vunpack.c.l.b16 %v762
        %v771 = vunpack.c.l.b16 %v763
        %v772 = vunpack.c.l.b16 %v764
        %v773 = vpack.c.b16 %v770, %v769
        %v774 = vpack.c.b16 %v772, %v771
        %v778 = vsel %vm731, %v760, 0
        %780 = vmatpush.bf16.msra.mxu0 0
        %781 = vmatpush.bf16.msra.mxu0 0
        %782 = vmatpush.bf16.msra.mxu0 0
        %783 = vmatpush.bf16.msra.mxu0 0
        %784 = vmatpush.bf16.msra.mxu0 0
        %785 = vmatpush.bf16.msra.mxu0 0
        %786 = vmatpush.bf16.msra.mxu0 %v774
        %787 = vmatpush.bf16.msra.mxu0 %v773
        %788 = vmatmul.bf16.gmra.mxu0 %v778
        %v789 = vpop.f32.mrf.mxu0
        %v790 = vadd.f32 0.0, %v789
        %v791 = vpop.f32.mrf.mxu0
        %792 = vdwg.mxu0
        %v793 = vpack.c.bf16 %v790, %v790
        %v794 = vld [vmem:[%s690] sm:$0xf]
        %v795 = vld [vmem:[%s690 + $0x4] sm:$0xf]
        %v796 = vld [vmem:[%s690 + $0x8] sm:$0xf]
        %v797 = vld [vmem:[%s690 + $0xc] sm:$0xf]
        %v802 = vunpack.c.l.b16 %v794
        %v803 = vunpack.c.l.b16 %v795
        %v804 = vunpack.c.l.b16 %v796
        %v805 = vunpack.c.l.b16 %v797
        %v806 = vpack.c.b16 %v803, %v802
        %v807 = vpack.c.b16 %v805, %v804
        %810 = vmatpush.bf16.msra.mxu0 0
        %811 = vmatpush.bf16.msra.mxu0 0
        %812 = vmatpush.bf16.msra.mxu0 0
        %813 = vmatpush.bf16.msra.mxu0 0
        %814 = vmatpush.bf16.msra.mxu0 0
        %815 = vmatpush.bf16.msra.mxu0 0
        %816 = vmatpush.bf16.msra.mxu0 %v807
        %817 = vmatpush.bf16.msra.mxu0 %v806
        %818 = vmatmul.bf16.gmra.mxu0 %v778
        %v819 = vpop.f32.mrf.mxu0
        %v820 = vadd.f32 0.0, %v819
        %v821 = vpop.f32.mrf.mxu0
        %822 = vdwg.mxu0
        %v823 = vpack.c.bf16 %v820, %v820
        %v824 = vld [vmem:[%s695] sm:$0xf]
        %v825 = vld [vmem:[%s695 + $0x4] sm:$0xf]
        %v826 = vld [vmem:[%s695 + $0x8] sm:$0xf]
        %v827 = vld [vmem:[%s695 + $0xc] sm:$0xf]
        %v832 = vunpack.c.l.b16 %v824
        %v833 = vunpack.c.l.b16 %v825
        %v834 = vunpack.c.l.b16 %v826
        %v835 = vunpack.c.l.b16 %v827
        %v836 = vpack.c.b16 %v833, %v832
        %v837 = vpack.c.b16 %v835, %v834
        %840 = vmatpush.bf16.msra.mxu0 0
        %841 = vmatpush.bf16.msra.mxu0 0
        %842 = vmatpush.bf16.msra.mxu0 0
        %843 = vmatpush.bf16.msra.mxu0 0
        %844 = vmatpush.bf16.msra.mxu0 0
        %845 = vmatpush.bf16.msra.mxu0 0
        %846 = vmatpush.bf16.msra.mxu0 %v837
        %847 = vmatpush.bf16.msra.mxu0 %v836
        %848 = vmatmul.bf16.gmra.mxu0 %v778
        %v849 = vpop.f32.mrf.mxu0
        %v850 = vadd.f32 0.0, %v849
        %v851 = vpop.f32.mrf.mxu0
        %852 = vdwg.mxu0
        %v853 = vpack.c.bf16 %v850, %v850
        %vm854 = vcmask 64512
        %v856 = vsel %vm854, %v793, 0
        %v859 = vsel %vm854, %v823, 0
        %861 = vmatpush.bf16.xpose.msra.mxu0 0
        %862 = vmatpush.bf16.xpose.msra.mxu0 0
        %863 = vmatpush.bf16.xpose.msra.mxu0 0
        %864 = vmatpush.bf16.xpose.msra.mxu0 0
        %865 = vmatpush.bf16.xpose.msra.mxu0 0
        %866 = vmatpush.bf16.xpose.msra.mxu0 0
        %867 = vmatpush.bf16.xpose.msra.mxu0 0
        %868 = vmatpush.bf16.xpose.msra.mxu0 %v859
        %869 = vmatmul.bf16.gmra.mxu0 %v856
        %v870 = vpop.f32.mrf.mxu0
        %v871 = vadd.f32 %v726, %v870
        %v872 = vpop.f32.mrf.mxu0
        %873 = vdwg.mxu0
        %v874 = vsel %vm854, %v871, -inf
        %875 = vmax.xlane.f32.xlu0 %v874
        %v876 = vpop.xlane.xlu0 %875
        %v877 = vsub.f32 %v871, %v876
        %v878 = vmul.f32 %v877, 1.442695
        %v879 = vpow.pop %v878
        %v880 = vsel %vm854, %v879, 0.0
        %881 = vadd.xlane.f32.xlu0 %v880
        %v882 = vpop.xlane.xlu0 %881
        %v883 = vrcp.pop %v882
        %v884 = vmul.f32 %v879, %v883
        %v885 = vpack.c.bf16 %v884, %v884
        %v887 = vsel %vm854, %v885, 0
        %vm889 = vcmask 1043456
        %v891 = vsel %vm889, %v853, 0
        %893 = vmatpush.bf16.msra.mxu0 0
        %894 = vmatpush.bf16.msra.mxu0 0
        %895 = vmatpush.bf16.msra.mxu0 0
        %896 = vmatpush.bf16.msra.mxu0 0
        %897 = vmatpush.bf16.msra.mxu0 0
        %898 = vmatpush.bf16.msra.mxu0 0
        %899 = vmatpush.bf16.msra.mxu0 0
        %900 = vmatpush.bf16.msra.mxu0 %v891
        %901 = vmatmul.bf16.gmra.mxu0 %v887
        %v902 = vpop.f32.mrf.mxu0
        %v903 = vadd.f32 0.0, %v902
        %v904 = vpop.f32.mrf.mxu0
        %905 = vdwg.mxu0
        %v906 = vpack.c.bf16 %v903, %v903
        %vm907 = vcmask 60416
        %908 = vst.msk [vmem:[#allocation3] sm:$0xf] %vm907, %v906
        %v910 = vunpack.c.l.b16 %v793
        %v911 = vpack.c.b16 %v910, %v910
        %912 = vrot.lane.b32.xlu0 %v911, 120
        %v913 = vpop.permute.xlu0 %912
        %v915 = vunpack.c.l.b16 %v823
        %v916 = vpack.c.b16 %v915, %v915
        %917 = vrot.lane.b32.xlu0 %v916, 120
        %v918 = vpop.permute.xlu0 %917
        %v920 = vsel %vm854, %v913, 0
        %v923 = vsel %vm854, %v918, 0
        %925 = vmatpush.bf16.xpose.msra.mxu0 0
        %926 = vmatpush.bf16.xpose.msra.mxu0 0
        %927 = vmatpush.bf16.xpose.msra.mxu0 0
        %928 = vmatpush.bf16.xpose.msra.mxu0 0
        %929 = vmatpush.bf16.xpose.msra.mxu0 0
        %930 = vmatpush.bf16.xpose.msra.mxu0 0
        %931 = vmatpush.bf16.xpose.msra.mxu0 0
        %932 = vmatpush.bf16.xpose.msra.mxu0 %v923
        %933 = vmatmul.bf16.gmra.mxu0 %v920
        %v934 = vpop.f32.mrf.mxu0
        %v935 = vadd.f32 %v727, %v934
        %v936 = vpop.f32.mrf.mxu0
        %937 = vdwg.mxu0
        %v938 = vsel %vm854, %v935, -inf
        %939 = vmax.xlane.f32.xlu0 %v938
        %v940 = vpop.xlane.xlu0 %939
        %v941 = vsub.f32 %v935, %v940
        %v942 = vmul.f32 %v941, 1.442695
        %v943 = vpow.pop %v942
        %v944 = vsel %vm854, %v943, 0.0
        %945 = vadd.xlane.f32.xlu0 %v944
        %v946 = vpop.xlane.xlu0 %945
        %v947 = vrcp.pop %v946
        %v948 = vmul.f32 %v943, %v947
        %v949 = vpack.c.bf16 %v948, %v948
        %v951 = vunpack.c.l.b16 %v853
        %v952 = vpack.c.b16 %v951, %v951
        %953 = vrot.lane.b32.xlu0 %v952, 120
        %v954 = vpop.permute.xlu0 %953
        %v956 = vsel %vm854, %v949, 0
        %v959 = vsel %vm889, %v954, 0
        %961 = vmatpush.bf16.msra.mxu0 0
        %962 = vmatpush.bf16.msra.mxu0 0
        %963 = vmatpush.bf16.msra.mxu0 0
        %964 = vmatpush.bf16.msra.mxu0 0
        %965 = vmatpush.bf16.msra.mxu0 0
        %966 = vmatpush.bf16.msra.mxu0 0
        %967 = vmatpush.bf16.msra.mxu0 0
        %968 = vmatpush.bf16.msra.mxu0 %v959
        %969 = vmatmul.bf16.gmra.mxu0 %v956
        %v970 = vpop.f32.mrf.mxu0
        %v971 = vadd.f32 0.0, %v970
        %v972 = vpop.f32.mrf.mxu0
        %973 = vdwg.mxu0
        %v974 = vpack.c.bf16 %v971, %v971
        %976 = vrot.lane.b32.xlu0 %v974, 8
        %v977 = vpop.permute.xlu0 %976
        %vm979 = vcmask 126016
        %980 = vst.msk [vmem:[#allocation3] sm:$0xf] %vm979, %v977
        %981 = vrot.lane.b32.xlu0 %v911, 112
        %v982 = vpop.permute.xlu0 %981
        %983 = vrot.lane.b32.xlu0 %v916, 112
        %v984 = vpop.permute.xlu0 %983
        %v986 = vsel %vm854, %v982, 0
        %v989 = vsel %vm854, %v984, 0
        %991 = vmatpush.bf16.xpose.msra.mxu0 0
        %992 = vmatpush.bf16.xpose.msra.mxu0 0
        %993 = vmatpush.bf16.xpose.msra.mxu0 0
        %994 = vmatpush.bf16.xpose.msra.mxu0 0
        %995 = vmatpush.bf16.xpose.msra.mxu0 0
        %996 = vmatpush.bf16.xpose.msra.mxu0 0
        %997 = vmatpush.bf16.xpose.msra.mxu0 0
        %998 = vmatpush.bf16.xpose.msra.mxu0 %v989
        %999 = vmatmul.bf16.gmra.mxu0 %v986
        %v1000 = vpop.f32.mrf.mxu0
        %v1001 = vadd.f32 %v728, %v1000
        %v1002 = vpop.f32.mrf.mxu0
        %1003 = vdwg.mxu0
        %v1004 = vsel %vm854, %v1001, -inf
        %1005 = vmax.xlane.f32.xlu0 %v1004
        %v1006 = vpop.xlane.xlu0 %1005
        %v1007 = vsub.f32 %v1001, %v1006
        %v1008 = vmul.f32 %v1007, 1.442695
        %v1009 = vpow.pop %v1008
        %v1010 = vsel %vm854, %v1009, 0.0
        %1011 = vadd.xlane.f32.xlu0 %v1010
        %v1012 = vpop.xlane.xlu0 %1011
        %v1013 = vrcp.pop %v1012
        %v1014 = vmul.f32 %v1009, %v1013
        %v1015 = vpack.c.bf16 %v1014, %v1014
        %1016 = vrot.lane.b32.xlu0 %v952, 112
        %v1017 = vpop.permute.xlu0 %1016
        %v1019 = vsel %vm854, %v1015, 0
        %v1022 = vsel %vm889, %v1017, 0
        %1024 = vmatpush.bf16.msra.mxu0 0
        %1025 = vmatpush.bf16.msra.mxu0 0
        %1026 = vmatpush.bf16.msra.mxu0 0
        %1027 = vmatpush.bf16.msra.mxu0 0
        %1028 = vmatpush.bf16.msra.mxu0 0
        %1029 = vmatpush.bf16.msra.mxu0 0
        %1030 = vmatpush.bf16.msra.mxu0 0
        %1031 = vmatpush.bf16.msra.mxu0 %v1022
        %1032 = vmatmul.bf16.gmra.mxu0 %v1019
        %v1033 = vpop.f32.mrf.mxu0
        %v1034 = vadd.f32 0.0, %v1033
        %v1035 = vpop.f32.mrf.mxu0
        %1036 = vdwg.mxu0
        %v1037 = vpack.c.bf16 %v1034, %v1034
        %1039 = vrot.lane.b32.xlu0 %v1037, 16
        %v1040 = vpop.permute.xlu0 %1039
        %vm1042 = vcmask 191616
        %1043 = vst.msk [vmem:[#allocation3] sm:$0xf] %vm1042, %v1040
        %1044 = vrot.lane.b32.xlu0 %v911, 104
        %v1045 = vpop.permute.xlu0 %1044
        %1046 = vrot.lane.b32.xlu0 %v916, 104
        %v1047 = vpop.permute.xlu0 %1046
        %v1049 = vsel %vm854, %v1045, 0
        %v1052 = vsel %vm854, %v1047, 0
        %1054 = vmatpush.bf16.xpose.msra.mxu0 0
        %1055 = vmatpush.bf16.xpose.msra.mxu0 0
        %1056 = vmatpush.bf16.xpose.msra.mxu0 0
        %1057 = vmatpush.bf16.xpose.msra.mxu0 0
        %1058 = vmatpush.bf16.xpose.msra.mxu0 0
        %1059 = vmatpush.bf16.xpose.msra.mxu0 0
        %1060 = vmatpush.bf16.xpose.msra.mxu0 0
        %1061 = vmatpush.bf16.xpose.msra.mxu0 %v1052
        %1062 = vmatmul.bf16.gmra.mxu0 %v1049
        %v1063 = vpop.f32.mrf.mxu0
        %v1064 = vadd.f32 %v729, %v1063
        %v1065 = vpop.f32.mrf.mxu0
        %1066 = vdwg.mxu0
        %v1067 = vsel %vm854, %v1064, -inf
        %1068 = vmax.xlane.f32.xlu0 %v1067
        %v1069 = vpop.xlane.xlu0 %1068
        %v1070 = vsub.f32 %v1064, %v1069
        %v1071 = vmul.f32 %v1070, 1.442695
        %v1072 = vpow.pop %v1071
        %v1073 = vsel %vm854, %v1072, 0.0
        %1074 = vadd.xlane.f32.xlu0 %v1073
        %v1075 = vpop.xlane.xlu0 %1074
        %v1076 = vrcp.pop %v1075
        %v1077 = vmul.f32 %v1072, %v1076
        %v1078 = vpack.c.bf16 %v1077, %v1077
        %1079 = vrot.lane.b32.xlu0 %v952, 104
        %v1080 = vpop.permute.xlu0 %1079
        %v1082 = vsel %vm854, %v1078, 0
        %v1085 = vsel %vm889, %v1080, 0
        %1087 = vmatpush.bf16.msra.mxu0 0
        %1088 = vmatpush.bf16.msra.mxu0 0
        %1089 = vmatpush.bf16.msra.mxu0 0
        %1090 = vmatpush.bf16.msra.mxu0 0
        %1091 = vmatpush.bf16.msra.mxu0 0
        %1092 = vmatpush.bf16.msra.mxu0 0
        %1093 = vmatpush.bf16.msra.mxu0 0
        %1094 = vmatpush.bf16.msra.mxu0 %v1085
        %1095 = vmatmul.bf16.gmra.mxu0 %v1082
        %v1096 = vpop.f32.mrf.mxu0
        %v1097 = vadd.f32 0.0, %v1096
        %v1098 = vpop.f32.mrf.mxu0
        %1099 = vdwg.mxu0
        %v1100 = vpack.c.bf16 %v1097, %v1097
        %1102 = vrot.lane.b32.xlu0 %v1100, 24
        %v1103 = vpop.permute.xlu0 %1102
        %vm1105 = vcmask 257216
        %1106 = vst.msk [vmem:[#allocation3] sm:$0xf] %vm1105, %v1103
        %v1107 = vld [vmem:[#allocation3] sm:$0xf]
        %v1108 = vld [vmem:[%s588] sm:$0xf]
        %v1109 = vld [vmem:[%s588 + $0x4] sm:$0xf]
        %v1110 = vld [vmem:[%s588 + $0x8] sm:$0xf]
        %v1111 = vld [vmem:[%s588 + $0xc] sm:$0xf]
        %v1116 = vunpack.c.l.b16 %v1108
        %v1117 = vunpack.c.l.b16 %v1109
        %v1118 = vunpack.c.l.b16 %v1110
        %v1119 = vunpack.c.l.b16 %v1111
        %v1120 = vpack.c.b16 %v1117, %v1116
        %v1121 = vpack.c.b16 %v1119, %v1118
        %v1125 = vsel %vm731, %v1107, 0
        %1127 = vmatpush.bf16.msra.mxu0 0
        %1128 = vmatpush.bf16.msra.mxu0 0
        %1129 = vmatpush.bf16.msra.mxu0 0
        %1130 = vmatpush.bf16.msra.mxu0 0
        %1131 = vmatpush.bf16.msra.mxu0 0
        %1132 = vmatpush.bf16.msra.mxu0 0
        %1133 = vmatpush.bf16.msra.mxu0 %v1121
        %1134 = vmatpush.bf16.msra.mxu0 %v1120
        %1135 = vmatmul.bf16.gmra.mxu0 %v1125
        %v1136 = vpop.f32.mrf.mxu0
        %v1137 = vadd.f32 0.0, %v1136
        %v1138 = vpop.f32.mrf.mxu0
        %1139 = vdwg.mxu0
        %v1140 = vadd.f32 %v713, %v1137
        %v1141 = vmul.f32 %v1140, %v1140
        %v1142 = vsel %vm731, %v1141, 0.0
        %1143 = vadd.xlane.f32.xlu0 %v1142
        %v1144 = vpop.xlane.xlu0 %1143
        %v1145 = vmul.f32 %v1144, %v741
        %v1146 = vadd.f32 %v1145, 1e-06
        %v1147 = vrsqrt.pop %v1146
        %v1148 = vmul.f32 %v1147, %v1146
        %v1149 = vmul.f32 %v1148, %v1147
        %v1150 = vmul.f32 0.5, %v1149
        %v1151 = vsub.f32 1.5, %v1150
        %v1152 = vmul.f32 %v1147, %v1151
        %vm1153 = vweird.f32 %v1146
        %vm1154 = vweird.f32 %v1147
        %vm1155 = vmor %vm1153, %vm1154
        %v1156 = vsel %vm1155, %v1147, %v1152
        %v1157 = vmul.f32 %v1140, %v1156
        %v1158 = vld [vmem:[%s698] sm:$0x1]
        %v1160 = vperm.slane %v1158, 0
        %v1162 = vmul.f32 %v1157, %v1160
        %v1163 = vpack.c.bf16 %v1162, %v1162
        %v1164 = vld [vmem:[%s598] sm:$0xf]
        %v1165 = vld [vmem:[%s598 + $0x4] sm:$0xf]
        %v1166 = vld [vmem:[%s598 + $0x8] sm:$0xf]
        %v1167 = vld [vmem:[%s598 + $0xc] sm:$0xf]
        %v1172 = vunpack.c.l.b16 %v1164
        %v1173 = vunpack.c.l.b16 %v1165
        %v1174 = vunpack.c.l.b16 %v1166
        %v1175 = vunpack.c.l.b16 %v1167
        %v1176 = vpack.c.b16 %v1173, %v1172
        %v1177 = vpack.c.b16 %v1175, %v1174
        %v1181 = vsel %vm731, %v1163, 0
        %1183 = vmatpush.bf16.msra.mxu0 0
        %1184 = vmatpush.bf16.msra.mxu0 0
        %1185 = vmatpush.bf16.msra.mxu0 0
        %1186 = vmatpush.bf16.msra.mxu0 0
        %1187 = vmatpush.bf16.msra.mxu0 0
        %1188 = vmatpush.bf16.msra.mxu0 0
        %1189 = vmatpush.bf16.msra.mxu0 %v1177
        %1190 = vmatpush.bf16.msra.mxu0 %v1176
        %1191 = vmatmul.bf16.gmra.mxu0 %v1181
        %v1192 = vpop.f32.mrf.mxu0
        %v1193 = vadd.f32 0.0, %v1192
        %v1194 = vpop.f32.mrf.mxu0
        %1195 = vdwg.mxu0
        %v1196 = vmax.f32 %v1193, 0.0
        %v1197 = vpack.c.bf16 %v1196, %v1196
        %v1198 = vld [vmem:[%s703] sm:$0xf]
        %v1199 = vld [vmem:[%s703 + $0x4] sm:$0xf]
        %v1200 = vld [vmem:[%s703 + $0x8] sm:$0xf]
        %v1201 = vld [vmem:[%s703 + $0xc] sm:$0xf]
        %v1202 = vld [vmem:[%s703 + $0x10] sm:$0xf]
        %v1203 = vld [vmem:[%s703 + $0x14] sm:$0xf]
        %v1204 = vld [vmem:[%s703 + $0x18] sm:$0xf]
        %v1205 = vld [vmem:[%s703 + $0x1c] sm:$0xf]
        %v1214 = vunpack.c.l.b16 %v1198
        %v1215 = vunpack.c.l.b16 %v1199
        %v1216 = vunpack.c.l.b16 %v1200
        %v1217 = vunpack.c.l.b16 %v1201
        %v1218 = vunpack.c.l.b16 %v1202
        %v1219 = vunpack.c.l.b16 %v1203
        %v1220 = vunpack.c.l.b16 %v1204
        %v1221 = vunpack.c.l.b16 %v1205
        %v1222 = vpack.c.b16 %v1215, %v1214
        %v1223 = vpack.c.b16 %v1217, %v1216
        %v1224 = vpack.c.b16 %v1219, %v1218
        %v1225 = vpack.c.b16 %v1221, %v1220
        %vm1230 = vcmask 523264
        %v1232 = vsel %vm1230, %v1197, 0
        %1234 = vmatpush.bf16.msra.mxu0 0
        %1235 = vmatpush.bf16.msra.mxu0 0
        %1236 = vmatpush.bf16.msra.mxu0 0
        %1237 = vmatpush.bf16.msra.mxu0 0
        %1238 = vmatpush.bf16.msra.mxu0 %v1225
        %1239 = vmatpush.bf16.msra.mxu0 %v1224
        %1240 = vmatpush.bf16.msra.mxu0 %v1223
        %1241 = vmatpush.bf16.msra.mxu0 %v1222
        %1242 = vmatmul.bf16.gmra.mxu0 %v1232
        %v1243 = vpop.f32.mrf.mxu0
        %v1244 = vadd.f32 0.0, %v1243
        %v1245 = vpop.f32.mrf.mxu0
        %1246 = vdwg.mxu0
        %v1247 = vadd.f32 %v1140, %v1244
        %1248 = vst.msk [vmem:[#allocation2] sm:$0xff] %vm731, %v1247
        %p1249 = scmp.eq.s32.totalorder %s43, 1
        // Predicated region
        $region97: #{tpu_custom_call.1} parent=67 // pred_check
          %p1250 = pneg %p1249
        $region98: #{tpu_custom_call.1} parent=67 // pred_check_branch
          %1252 = sbr.rel (%p1250) target = $region100
        $region99: #{tpu_custom_call.1} parent=67 // pred_region
          %v1253 = vmul.f32 %v1247, %v1247
          %v1254 = vsel %vm731, %v1253, 0.0
          %1255 = vadd.xlane.f32.xlu0 %v1254
          %v1256 = vpop.xlane.xlu0 %1255
          %v1257 = vmul.f32 %v1256, %v741
          %v1258 = vadd.f32 %v1257, 1e-06
          %v1259 = vrsqrt.pop %v1258
          %v1260 = vmul.f32 %v1259, %v1258
          %v1261 = vmul.f32 %v1260, %v1259
          %v1262 = vmul.f32 0.5, %v1261
          %v1263 = vsub.f32 1.5, %v1262
          %v1264 = vmul.f32 %v1259, %v1263
          %vm1265 = vweird.f32 %v1258
          %vm1266 = vweird.f32 %v1259
          %vm1267 = vmor %vm1265, %vm1266
          %v1268 = vsel %vm1267, %v1259, %v1264
          %v1269 = vmul.f32 %v1247, %v1268
          %v1270 = vld [vmem:[%s11] sm:$0x1]
          %v1272 = vperm.slane %v1270, 0
          %v1274 = vmul.f32 %v1269, %v1272
          %1275 = vst.msk [vmem:[%s680] sm:$0xff] %vm731, %v1274
        $region100: #{tpu_custom_call.1} parent=67 // pred_fallthru
          _
        %s1276 = sand.u32 %s360, 1
        %s1277 = scalar_lea.sflag [#allocation6], %s1276
        %s1278 = sand.u32 %s360, 1
        %s1279 = smul.addr %s1278, 8
        %s1280 = scalar_lea.vmem [#allocation15], %s1279
        // Predicated region
        $region101: #{tpu_custom_call.1} parent=67 // pred_check
          %p1281 = pneg %p370
        $region102: #{tpu_custom_call.1} parent=67 // pred_check_branch
          %1283 = sbr.rel (%p1281) target = $region104
        $region103: #{tpu_custom_call.1} parent=67 // pred_region
          %1285 = vsyncadd %s1277, 0
          %s1286 = smul.addr %s42, 8
          %s1287 = scalar_lea.hbm %s12, %s1286
          %s1289 = sshll.u32 %s1280, 4
          %s1290 = int_to_ptr.vmem [resolvable:$true] %s1289
          %s1291 = sshll.u32 %s1287, 4
          %s1292 = int_to_ptr.hbm [resolvable:$true] %s1291
          %1294 = dma.vmem_to_hbm [thread:$0]  %s1290, 128, %s1292, %s1277
        $region104: #{tpu_custom_call.1} parent=67 // pred_fallthru
          _
      $region68: #{tpu_custom_call.1} parent=5 // pred_fallthru
        _
      %p1295 = scmp.le.s32.totalorder 2, %s33
      // Predicated region
      $region105: #{tpu_custom_call.1} parent=5 // pred_check
        %p1296 = pneg %p1295
      $region106: #{tpu_custom_call.1} parent=5 // pred_check_branch
        %1298 = sbr.rel (%p1296) target = $region108
      $region107: #{tpu_custom_call.1} parent=5 // pred_region
        %s1299 = ssub.s32 %s33, 2
        // Predicated region
        $region109: #{tpu_custom_call.1} parent=107 // pred_check
          %p1300 = pneg %p376
        $region110: #{tpu_custom_call.1} parent=107 // pred_check_branch
          %1302 = sbr.rel (%p1300) target = $region112
        $region111: #{tpu_custom_call.1} parent=107 // pred_region
          %s1303 = sand.u32 %s361, 1
          %s1304 = scalar_lea.sflag [#allocation6], %s1303
          %s1305 = sand.u32 %s361, 1
          %s1306 = smul.addr %s1305, 8
          %s1307 = scalar_lea.vmem [#allocation15], %s1306
          %1309 = dma.done %s1304, 128
        $region112: #{tpu_custom_call.1} parent=107 // pred_fallthru
          _
      $region108: #{tpu_custom_call.1} parent=5 // pred_fallthru
        _
    $region6: #{tpu_custom_call.1} parent=1 // loop_footer
      %s37 = sadd.s32 1, %s33
    $region7: #{tpu_custom_call.1} parent=1 // loop_footer_branch
      %32 = sbr.rel target = $region3
    $region8: #{tpu_custom_call.1} parent=1 // loop_exit
      _
    %1310 = vsyncpa [#allocation5], 1
    %s1311 = scalar_lea.sflag [#allocation5], 1
    %1312 = vsyncpa %s1311, 1
    %1313 = vsyncpa [#allocation8], 1
    %s1314 = scalar_lea.sflag [#allocation8], 1
    %1315 = vsyncpa %s1314, 1
    %1316 = vsyncpa [#allocation11], 1
    %s1317 = scalar_lea.sflag [#allocation11], 1
    %1318 = vsyncpa %s1317, 1
    %1319 = vsyncpa [#allocation14], 1
    %s1320 = scalar_lea.sflag [#allocation14], 1
    %1321 = vsyncpa %s1320, 1
    %1322 = vsyncpa [#allocation6], 1
    %s1323 = scalar_lea.sflag [#allocation6], 1
    %1324 = vsyncpa %s1323, 1

</llo_original>
